<compile_context>
chip_gen: v7x
topology: tpu7x:2x2x1
jax: 0.10.0
libtpu: 0.0.40
codegen_flags: <defaults>
</compile_context>

<pallas_src>
import functools
import math

import jax
import jax.numpy as jnp
from jax.experimental import pallas as pl
from jax.experimental.pallas import tpu as pltpu


# ----------------------------------------------------------------------------
# Fused forward kernel
# ----------------------------------------------------------------------------
def _vae_forward_kernel(
    x_ref, noise_ref,
    qzw1_ref, qzp1_ref, qzw2_ref, qzp2_ref, qzw3mu_ref, qzw3lv_ref, qzb3_ref,
    pxw1_ref, pxp1_ref, pxw2_ref, pxp2_ref, pxw3_ref, pxb3_ref, logsig_ref,
    z_ref, mu_ref, logvar_ref, rec_ref, loss_rec_ref, loss_z_ref, loss_tot_ref,
):
    x = x_ref[...]                       # (B, nx) f32
    b = x.shape[0]
    dot_dtype = qzw1_ref.dtype           # bf16 weights streamed from HBM

    def hidden(h, w_ref, p_ref):
        # Linear -> BatchNorm1d (batch stats, eps=1e-5) -> LeakyReLU(0.01)
        y = jnp.dot(h.astype(dot_dtype), w_ref[...],
                    preferred_element_type=jnp.float32)
        y = y + p_ref[0:1, :]                                   # bias
        mean = jnp.mean(y, axis=0, keepdims=True)
        var = jnp.mean((y - mean) ** 2, axis=0, keepdims=True)
        y = (y - mean) * jax.lax.rsqrt(var + 1e-5)
        y = y * p_ref[1:2, :] + p_ref[2:3, :]                   # gamma, beta
        return jnp.maximum(y, 0.01 * y)                         # LeakyReLU

    # ---- Encoder Qz(x) ----
    h = hidden(x, qzw1_ref, qzp1_ref)
    h = hidden(h, qzw2_ref, qzp2_ref)
    hd = h.astype(dot_dtype)
    mu = jnp.dot(hd, qzw3mu_ref[...],
                 preferred_element_type=jnp.float32) + qzb3_ref[0:1, :]
    logvar = jnp.dot(hd, qzw3lv_ref[...],
                     preferred_element_type=jnp.float32) + qzb3_ref[1:2, :]

    # ---- Reparameterization ----
    std = jnp.exp(0.5 * logvar)
    z = mu + std * noise_ref[...]
    mu_ref[...] = mu
    logvar_ref[...] = logvar
    z_ref[...] = z

    # ---- Decoder Px(z) ----
    h = hidden(z, pxw1_ref, pxp1_ref)
    h = hidden(h, pxw2_ref, pxp2_ref)
    rec = jnp.dot(h.astype(dot_dtype), pxw3_ref[...],
                  preferred_element_type=jnp.float32) + pxb3_ref[...]
    rec_ref[...] = rec

    # ---- softclip(logsigma_x, -7, 7) on the (1, nx) row ----
    t = logsig_ref[...]

    def softplus(v):
        return jnp.maximum(v, 0.0) + jnp.log(1.0 + jnp.exp(-jnp.abs(v)))

    lo, hi = -7.0, 7.0
    logsig = lo + softplus(t - lo) - softplus(t - hi)

    # ---- Gaussian reconstruction NLL: -Normal(rec, sigma).log_prob(x).sum(-1).mean() ----
    inv_sigma2 = jnp.exp(-2.0 * logsig)                         # (1, nx) once
    half_log_2pi = 0.5 * math.log(2.0 * math.pi)
    diff = x - rec
    nll = 0.5 * diff * diff * inv_sigma2 + logsig + half_log_2pi
    nll_row = jnp.sum(nll, axis=-1, keepdims=True)              # (B, 1)
    loss_rec = jnp.sum(nll_row, axis=0, keepdims=True) * (1.0 / b)

    # ---- KL(q(z|x) || N(0, 1)).sum(-1).mean() ----
    kld = -0.5 * (1.0 + logvar - mu * mu - jnp.exp(logvar))
    kld_row = jnp.sum(kld, axis=-1, keepdims=True)              # (B, 1)
    loss_z = jnp.sum(kld_row, axis=0, keepdims=True) * (1.0 / b)

    loss_rec_ref[...] = loss_rec
    loss_z_ref[...] = loss_z
    loss_tot_ref[...] = loss_rec + loss_z


# ----------------------------------------------------------------------------
# Parameter construction (deterministic, PyTorch-default-like init)
# ----------------------------------------------------------------------------
def _linear_params(key, fan_in, fan_out):
    kw, kb = jax.random.split(key)
    bound = 1.0 / math.sqrt(fan_in)
    w = jax.random.uniform(kw, (fan_in, fan_out), jnp.float32, -bound, bound)
    b = jax.random.uniform(kb, (fan_out,), jnp.float32, -bound, bound)
    return w, b


def init_params(key, nx, nh, nz):
    keys = jax.random.split(key, 6)
    p = {}
    # Qz: [nx, nh, nh, 2*nz]
    p["qz_w1"], p["qz_b1"] = _linear_params(keys[0], nx, nh)
    p["qz_w2"], p["qz_b2"] = _linear_params(keys[1], nh, nh)
    p["qz_w3"], p["qz_b3"] = _linear_params(keys[2], nh, 2 * nz)
    # Px: [nz, nh, nh, nx]
    p["px_w1"], p["px_b1"] = _linear_params(keys[3], nz, nh)
    p["px_w2"], p["px_b2"] = _linear_params(keys[4], nh, nh)
    p["px_w3"], p["px_b3"] = _linear_params(keys[5], nh, nx)
    # BatchNorm affine params (PyTorch init: gamma=1, beta=0)
    for name, dim in [("qz1", nh), ("qz2", nh), ("px1", nh), ("px2", nh)]:
        p[f"{name}_g"] = jnp.ones((dim,), jnp.float32)
        p[f"{name}_be"] = jnp.zeros((dim,), jnp.float32)
    # logsigma_x parameter
    p["logsigma_x"] = jnp.zeros((nx,), jnp.float32)
    return p


def pack_params(params, nz, weight_dtype=jnp.bfloat16):
    """One-time repack: bf16 weights, (3,N)-packed bias/gamma/beta, split head."""
    def wc(w):
        return w.astype(weight_dtype)

    def p3(b, g, be):
        return jnp.stack([b, g, be], axis=0).astype(jnp.float32)   # (3, N)

    return {
        "qz_w1": wc(params["qz_w1"]),
        "qz_p1": p3(params["qz_b1"], params["qz1_g"], params["qz1_be"]),
        "qz_w2": wc(params["qz_w2"]),
        "qz_p2": p3(params["qz_b2"], params["qz2_g"], params["qz2_be"]),
        "qz_w3_mu": wc(params["qz_w3"][:, :nz]),
        "qz_w3_lv": wc(params["qz_w3"][:, nz:]),
        "qz_b3": jnp.stack([params["qz_b3"][:nz], params["qz_b3"][nz:]], axis=0),
        "px_w1": wc(params["px_w1"]),
        "px_p1": p3(params["px_b1"], params["px1_g"], params["px1_be"]),
        "px_w2": wc(params["px_w2"]),
        "px_p2": p3(params["px_b2"], params["px2_g"], params["px2_be"]),
        "px_w3": wc(params["px_w3"]),
        "px_b3": params["px_b3"].reshape(1, -1),
        "logsigma_x": params["logsigma_x"].reshape(1, -1),
    }


# ----------------------------------------------------------------------------
# Forward pass (mirrors VAE_Type00.forward) — single pallas_call
# ----------------------------------------------------------------------------
def vae_type00_forward(packed, x_img, noise):
    B = x_img.shape[0]
    x = x_img.reshape(B, -1).astype(jnp.float32)   # nn.Flatten()
    nx = x.shape[1]
    nz = noise.shape[1]

    def spec(shape):
        return pl.BlockSpec(shape, lambda i: (0, 0))

    in_arrays = [
        x, noise,
        packed["qz_w1"], packed["qz_p1"], packed["qz_w2"], packed["qz_p2"],
        packed["qz_w3_mu"], packed["qz_w3_lv"], packed["qz_b3"],
        packed["px_w1"], packed["px_p1"], packed["px_w2"], packed["px_p2"],
        packed["px_w3"], packed["px_b3"], packed["logsigma_x"],
    ]
    in_specs = [spec(a.shape) for a in in_arrays]

    out_shapes = (
        jax.ShapeDtypeStruct((B, nz), jnp.float32),   # z
        jax.ShapeDtypeStruct((B, nz), jnp.float32),   # mu
        jax.ShapeDtypeStruct((B, nz), jnp.float32),   # logvar
        jax.ShapeDtypeStruct((B, nx), jnp.float32),   # rec
        jax.ShapeDtypeStruct((1, 1), jnp.float32),    # loss_rec
        jax.ShapeDtypeStruct((1, 1), jnp.float32),    # loss_z
        jax.ShapeDtypeStruct((1, 1), jnp.float32),    # total_loss
    )
    out_specs = tuple(spec(s.shape) for s in out_shapes)

    z, mu, logvar, rec, lrec, lz, ltot = pl.pallas_call(
        _vae_forward_kernel,
        out_shape=out_shapes,
        grid=(1,),
        in_specs=in_specs,
        out_specs=out_specs,
        compiler_params=pltpu.CompilerParams(
            dimension_semantics=("arbitrary",),
        ),
    )(*in_arrays)

    return {
        "z": z, "mu": mu, "logvar": logvar, "rec": rec,
        "losses": {
            "rec": lrec[0, 0],
            "z": lz[0, 0],
            "total_loss": ltot[0, 0],
        },
    }


# ----------------------------------------------------------------------------
if __name__ == "__main__":
    # Small shapes consistent with the module (nx = C*H*W); B=8 fills the
    # sublane dimension and gives meaningful BatchNorm batch statistics.
    B, C, H, W = 8, 1, 16, 16
    nx, nh, nz = C * H * W, 256, 64

    key = jax.random.PRNGKey(0)
    k_param, k_x, k_noise = jax.random.split(key, 3)

    params = init_params(k_param, nx, nh, nz)
    packed = pack_params(params, nz)                           # one-time repack
    x_img = jax.random.uniform(k_x, (B, C, H, W), jnp.float32)  # NCHW input
    noise = jax.random.normal(k_noise, (B, nz), jnp.float32)    # torch.randn_like(mu)

    fwd = jax.jit(vae_type00_forward)
    out = fwd(packed, x_img, noise)
    jax.block_until_ready(out)

    losses = out["losses"]
    assert out["rec"].shape == (B, nx)
    assert out["z"].shape == (B, nz)
    assert out["mu"].shape == (B, nz)
    assert out["logvar"].shape == (B, nz)
    assert all(bool(jnp.isfinite(jnp.asarray(v))) for v in
               [losses["rec"], losses["z"], losses["total_loss"]])
    print("KERNEL_OK")
</pallas_src>

<mosaic_0001>
module attributes {stable_mosaic.version = 11 : i64} {
  func.func @_vae_forward_kernel(%arg0: i32, %arg1: memref<8x256xf32, #tpu.memory_space<vmem>>, %arg2: memref<8x64xf32, #tpu.memory_space<vmem>>, %arg3: memref<256x256xbf16, #tpu.memory_space<vmem>>, %arg4: memref<3x256xf32, #tpu.memory_space<vmem>>, %arg5: memref<256x256xbf16, #tpu.memory_space<vmem>>, %arg6: memref<3x256xf32, #tpu.memory_space<vmem>>, %arg7: memref<256x64xbf16, #tpu.memory_space<vmem>>, %arg8: memref<256x64xbf16, #tpu.memory_space<vmem>>, %arg9: memref<2x64xf32, #tpu.memory_space<vmem>>, %arg10: memref<64x256xbf16, #tpu.memory_space<vmem>>, %arg11: memref<3x256xf32, #tpu.memory_space<vmem>>, %arg12: memref<256x256xbf16, #tpu.memory_space<vmem>>, %arg13: memref<3x256xf32, #tpu.memory_space<vmem>>, %arg14: memref<256x256xbf16, #tpu.memory_space<vmem>>, %arg15: memref<1x256xf32, #tpu.memory_space<vmem>>, %arg16: memref<1x256xf32, #tpu.memory_space<vmem>>, %arg17: memref<8x64xf32, #tpu.memory_space<vmem>>, %arg18: memref<8x64xf32, #tpu.memory_space<vmem>>, %arg19: memref<8x64xf32, #tpu.memory_space<vmem>>, %arg20: memref<8x256xf32, #tpu.memory_space<vmem>>, %arg21: memref<1x1xf32, #tpu.memory_space<vmem>>, %arg22: memref<1x1xf32, #tpu.memory_space<vmem>>, %arg23: memref<1x1xf32, #tpu.memory_space<vmem>>) attributes {dimension_semantics = [#tpu.dimension_semantics<arbitrary>], iteration_bounds = array<i64: 1>, scalar_prefetch = 0 : i64, scratch_operands = 0 : i64, tpu.core_type = #tpu.core_type<tc>, window_params = [{pipeline_mode = #tpu.pipeline_mode<synchronous>, transform_indices = @transform_0, window_bounds = array<i64: 8, 256>}, {pipeline_mode = #tpu.pipeline_mode<synchronous>, transform_indices = @transform_1, window_bounds = array<i64: 8, 64>}, {pipeline_mode = #tpu.pipeline_mode<synchronous>, transform_indices = @transform_2, window_bounds = array<i64: 256, 256>}, {pipeline_mode = #tpu.pipeline_mode<synchronous>, transform_indices = @transform_3, window_bounds = array<i64: 3, 256>}, {pipeline_mode = #tpu.pipeline_mode<synchronous>, transform_indices = @transform_4, window_bounds = array<i64: 256, 256>}, {pipeline_mode = #tpu.pipeline_mode<synchronous>, transform_indices = @transform_5, window_bounds = array<i64: 3, 256>}, {pipeline_mode = #tpu.pipeline_mode<synchronous>, transform_indices = @transform_6, window_bounds = array<i64: 256, 64>}, {pipeline_mode = #tpu.pipeline_mode<synchronous>, transform_indices = @transform_7, window_bounds = array<i64: 256, 64>}, {pipeline_mode = #tpu.pipeline_mode<synchronous>, transform_indices = @transform_8, window_bounds = array<i64: 2, 64>}, {pipeline_mode = #tpu.pipeline_mode<synchronous>, transform_indices = @transform_9, window_bounds = array<i64: 64, 256>}, {pipeline_mode = #tpu.pipeline_mode<synchronous>, transform_indices = @transform_10, window_bounds = array<i64: 3, 256>}, {pipeline_mode = #tpu.pipeline_mode<synchronous>, transform_indices = @transform_11, window_bounds = array<i64: 256, 256>}, {pipeline_mode = #tpu.pipeline_mode<synchronous>, transform_indices = @transform_12, window_bounds = array<i64: 3, 256>}, {pipeline_mode = #tpu.pipeline_mode<synchronous>, transform_indices = @transform_13, window_bounds = array<i64: 256, 256>}, {pipeline_mode = #tpu.pipeline_mode<synchronous>, transform_indices = @transform_14, window_bounds = array<i64: 1, 256>}, {pipeline_mode = #tpu.pipeline_mode<synchronous>, transform_indices = @transform_15, window_bounds = array<i64: 1, 256>}, {pipeline_mode = #tpu.pipeline_mode<synchronous>, transform_indices = @transform_16, window_bounds = array<i64: 8, 64>}, {pipeline_mode = #tpu.pipeline_mode<synchronous>, transform_indices = @transform_17, window_bounds = array<i64: 8, 64>}, {pipeline_mode = #tpu.pipeline_mode<synchronous>, transform_indices = @transform_18, window_bounds = array<i64: 8, 64>}, {pipeline_mode = #tpu.pipeline_mode<synchronous>, transform_indices = @transform_19, window_bounds = array<i64: 8, 256>}, {pipeline_mode = #tpu.pipeline_mode<synchronous>, transform_indices = @transform_20, window_bounds = array<i64: 1, 1>}, {pipeline_mode = #tpu.pipeline_mode<synchronous>, transform_indices = @transform_21, window_bounds = array<i64: 1, 1>}, {pipeline_mode = #tpu.pipeline_mode<synchronous>, transform_indices = @transform_22, window_bounds = array<i64: 1, 1>}]} {
    %c0 = arith.constant 0 : index
    %c0_0 = arith.constant 0 : index
    %0 = vector.load %arg1[%c0, %c0_0] : memref<8x256xf32, #tpu.memory_space<vmem>>, vector<8x256xf32>
    %1 = arith.truncf %0 : vector<8x256xf32> to vector<8x256xbf16>
    %c0_1 = arith.constant 0 : index
    %c0_2 = arith.constant 0 : index
    %2 = vector.load %arg3[%c0_1, %c0_2] : memref<256x256xbf16, #tpu.memory_space<vmem>>, vector<256x256xbf16>
    %cst = arith.constant dense<0.000000e+00> : vector<8x256xf32>
    %3 = tpu.matmul %1, %2, %cst {dimension_numbers = #tpu.dot_dimension_numbers<[1], [0], [0], [1], [0, 0, 1, 1], [], []>} : vector<8x256xbf16>, vector<256x256xbf16>, vector<8x256xf32> -> vector<8x256xf32>
    %c0_3 = arith.constant 0 : index
    %c0_4 = arith.constant 0 : index
    %4 = vector.load %arg4[%c0_3, %c0_4] : memref<3x256xf32, #tpu.memory_space<vmem>>, vector<1x256xf32>
    %5 = vector.broadcast %4 : vector<1x256xf32> to vector<8x256xf32>
    %6 = arith.addf %3, %5 : vector<8x256xf32>
    %cst_5 = arith.constant dense<0.000000e+00> : vector<256xf32>
    %7 = vector.multi_reduction <add>, %6, %cst_5 [0] : vector<8x256xf32> to vector<256xf32>
    %8 = vector.shape_cast %7 : vector<256xf32> to vector<1x256xf32>
    %cst_6 = arith.constant 8.000000e+00 : f32
    %9 = vector.broadcast %cst_6 : f32 to vector<1x256xf32>
    %10 = arith.divf %8, %9 : vector<1x256xf32>
    %11 = vector.broadcast %10 : vector<1x256xf32> to vector<8x256xf32>
    %12 = arith.subf %6, %11 : vector<8x256xf32>
    %13 = arith.mulf %12, %12 : vector<8x256xf32>
    %cst_7 = arith.constant dense<0.000000e+00> : vector<256xf32>
    %14 = vector.multi_reduction <add>, %13, %cst_7 [0] : vector<8x256xf32> to vector<256xf32>
    %15 = vector.shape_cast %14 : vector<256xf32> to vector<1x256xf32>
    %cst_8 = arith.constant 8.000000e+00 : f32
    %16 = vector.broadcast %cst_8 : f32 to vector<1x256xf32>
    %17 = arith.divf %15, %16 : vector<1x256xf32>
    %18 = vector.broadcast %10 : vector<1x256xf32> to vector<8x256xf32>
    %19 = arith.subf %6, %18 : vector<8x256xf32>
    %cst_9 = arith.constant 9.99999974E-6 : f32
    %20 = vector.broadcast %cst_9 : f32 to vector<1x256xf32>
    %21 = arith.addf %17, %20 : vector<1x256xf32>
    %22 = math.rsqrt %21 : vector<1x256xf32>
    %23 = vector.broadcast %22 : vector<1x256xf32> to vector<8x256xf32>
    %24 = arith.mulf %19, %23 : vector<8x256xf32>
    %c1 = arith.constant 1 : index
    %c0_10 = arith.constant 0 : index
    %25 = vector.load %arg4[%c1, %c0_10] : memref<3x256xf32, #tpu.memory_space<vmem>>, vector<1x256xf32>
    %26 = vector.broadcast %25 : vector<1x256xf32> to vector<8x256xf32>
    %27 = arith.mulf %24, %26 : vector<8x256xf32>
    %c2 = arith.constant 2 : index
    %c0_11 = arith.constant 0 : index
    %28 = vector.load %arg4[%c2, %c0_11] : memref<3x256xf32, #tpu.memory_space<vmem>>, vector<1x256xf32>
    %29 = vector.broadcast %28 : vector<1x256xf32> to vector<8x256xf32>
    %30 = arith.addf %27, %29 : vector<8x256xf32>
    %cst_12 = arith.constant 0.00999999977 : f32
    %31 = vector.broadcast %cst_12 : f32 to vector<8x256xf32>
    %32 = arith.mulf %31, %30 : vector<8x256xf32>
    %33 = arith.maximumf %30, %32 : vector<8x256xf32>
    %34 = arith.truncf %33 : vector<8x256xf32> to vector<8x256xbf16>
    %c0_13 = arith.constant 0 : index
    %c0_14 = arith.constant 0 : index
    %35 = vector.load %arg5[%c0_13, %c0_14] : memref<256x256xbf16, #tpu.memory_space<vmem>>, vector<256x256xbf16>
    %cst_15 = arith.constant dense<0.000000e+00> : vector<8x256xf32>
    %36 = tpu.matmul %34, %35, %cst_15 {dimension_numbers = #tpu.dot_dimension_numbers<[1], [0], [0], [1], [0, 0, 1, 1], [], []>} : vector<8x256xbf16>, vector<256x256xbf16>, vector<8x256xf32> -> vector<8x256xf32>
    %c0_16 = arith.constant 0 : index
    %c0_17 = arith.constant 0 : index
    %37 = vector.load %arg6[%c0_16, %c0_17] : memref<3x256xf32, #tpu.memory_space<vmem>>, vector<1x256xf32>
    %38 = vector.broadcast %37 : vector<1x256xf32> to vector<8x256xf32>
    %39 = arith.addf %36, %38 : vector<8x256xf32>
    %cst_18 = arith.constant dense<0.000000e+00> : vector<256xf32>
    %40 = vector.multi_reduction <add>, %39, %cst_18 [0] : vector<8x256xf32> to vector<256xf32>
    %41 = vector.shape_cast %40 : vector<256xf32> to vector<1x256xf32>
    %cst_19 = arith.constant 8.000000e+00 : f32
    %42 = vector.broadcast %cst_19 : f32 to vector<1x256xf32>
    %43 = arith.divf %41, %42 : vector<1x256xf32>
    %44 = vector.broadcast %43 : vector<1x256xf32> to vector<8x256xf32>
    %45 = arith.subf %39, %44 : vector<8x256xf32>
    %46 = arith.mulf %45, %45 : vector<8x256xf32>
    %cst_20 = arith.constant dense<0.000000e+00> : vector<256xf32>
    %47 = vector.multi_reduction <add>, %46, %cst_20 [0] : vector<8x256xf32> to vector<256xf32>
    %48 = vector.shape_cast %47 : vector<256xf32> to vector<1x256xf32>
    %cst_21 = arith.constant 8.000000e+00 : f32
    %49 = vector.broadcast %cst_21 : f32 to vector<1x256xf32>
    %50 = arith.divf %48, %49 : vector<1x256xf32>
    %51 = vector.broadcast %43 : vector<1x256xf32> to vector<8x256xf32>
    %52 = arith.subf %39, %51 : vector<8x256xf32>
    %cst_22 = arith.constant 9.99999974E-6 : f32
    %53 = vector.broadcast %cst_22 : f32 to vector<1x256xf32>
    %54 = arith.addf %50, %53 : vector<1x256xf32>
    %55 = math.rsqrt %54 : vector<1x256xf32>
    %56 = vector.broadcast %55 : vector<1x256xf32> to vector<8x256xf32>
    %57 = arith.mulf %52, %56 : vector<8x256xf32>
    %c1_23 = arith.constant 1 : index
    %c0_24 = arith.constant 0 : index
    %58 = vector.load %arg6[%c1_23, %c0_24] : memref<3x256xf32, #tpu.memory_space<vmem>>, vector<1x256xf32>
    %59 = vector.broadcast %58 : vector<1x256xf32> to vector<8x256xf32>
    %60 = arith.mulf %57, %59 : vector<8x256xf32>
    %c2_25 = arith.constant 2 : index
    %c0_26 = arith.constant 0 : index
    %61 = vector.load %arg6[%c2_25, %c0_26] : memref<3x256xf32, #tpu.memory_space<vmem>>, vector<1x256xf32>
    %62 = vector.broadcast %61 : vector<1x256xf32> to vector<8x256xf32>
    %63 = arith.addf %60, %62 : vector<8x256xf32>
    %cst_27 = arith.constant 0.00999999977 : f32
    %64 = vector.broadcast %cst_27 : f32 to vector<8x256xf32>
    %65 = arith.mulf %64, %63 : vector<8x256xf32>
    %66 = arith.maximumf %63, %65 : vector<8x256xf32>
    %67 = arith.truncf %66 : vector<8x256xf32> to vector<8x256xbf16>
    %c0_28 = arith.constant 0 : index
    %c0_29 = arith.constant 0 : index
    %68 = vector.load %arg7[%c0_28, %c0_29] : memref<256x64xbf16, #tpu.memory_space<vmem>>, vector<256x64xbf16>
    %cst_30 = arith.constant dense<0.000000e+00> : vector<8x64xf32>
    %69 = tpu.matmul %67, %68, %cst_30 {dimension_numbers = #tpu.dot_dimension_numbers<[1], [0], [0], [1], [0, 0, 1, 1], [], []>} : vector<8x256xbf16>, vector<256x64xbf16>, vector<8x64xf32> -> vector<8x64xf32>
    %c0_31 = arith.constant 0 : index
    %c0_32 = arith.constant 0 : index
    %70 = vector.load %arg9[%c0_31, %c0_32] : memref<2x64xf32, #tpu.memory_space<vmem>>, vector<1x64xf32>
    %71 = vector.broadcast %70 : vector<1x64xf32> to vector<8x64xf32>
    %72 = arith.addf %69, %71 : vector<8x64xf32>
    %c0_33 = arith.constant 0 : index
    %c0_34 = arith.constant 0 : index
    %73 = vector.load %arg8[%c0_33, %c0_34] : memref<256x64xbf16, #tpu.memory_space<vmem>>, vector<256x64xbf16>
    %cst_35 = arith.constant dense<0.000000e+00> : vector<8x64xf32>
    %74 = tpu.matmul %67, %73, %cst_35 {dimension_numbers = #tpu.dot_dimension_numbers<[1], [0], [0], [1], [0, 0, 1, 1], [], []>} : vector<8x256xbf16>, vector<256x64xbf16>, vector<8x64xf32> -> vector<8x64xf32>
    %c1_36 = arith.constant 1 : index
    %c0_37 = arith.constant 0 : index
    %75 = vector.load %arg9[%c1_36, %c0_37] : memref<2x64xf32, #tpu.memory_space<vmem>>, vector<1x64xf32>
    %76 = vector.broadcast %75 : vector<1x64xf32> to vector<8x64xf32>
    %77 = arith.addf %74, %76 : vector<8x64xf32>
    %cst_38 = arith.constant 5.000000e-01 : f32
    %78 = vector.broadcast %cst_38 : f32 to vector<8x64xf32>
    %79 = arith.mulf %78, %77 : vector<8x64xf32>
    %80 = math.exp %79 : vector<8x64xf32>
    %c0_39 = arith.constant 0 : index
    %c0_40 = arith.constant 0 : index
    %81 = vector.load %arg2[%c0_39, %c0_40] : memref<8x64xf32, #tpu.memory_space<vmem>>, vector<8x64xf32>
    %82 = arith.mulf %80, %81 : vector<8x64xf32>
    %83 = arith.addf %72, %82 : vector<8x64xf32>
    %c0_41 = arith.constant 0 : index
    %c0_42 = arith.constant 0 : index
    %84 = vector.load %arg18[%c0_41, %c0_42] : memref<8x64xf32, #tpu.memory_space<vmem>>, vector<8x64xf32>
    tpu.vector_store %arg18[%c0_41, %c0_42], %72 {strides = array<i32>} : memref<8x64xf32, #tpu.memory_space<vmem>>, vector<8x64xf32>,
    %c0_43 = arith.constant 0 : index
    %c0_44 = arith.constant 0 : index
    %85 = vector.load %arg19[%c0_43, %c0_44] : memref<8x64xf32, #tpu.memory_space<vmem>>, vector<8x64xf32>
    tpu.vector_store %arg19[%c0_43, %c0_44], %77 {strides = array<i32>} : memref<8x64xf32, #tpu.memory_space<vmem>>, vector<8x64xf32>,
    %c0_45 = arith.constant 0 : index
    %c0_46 = arith.constant 0 : index
    %86 = vector.load %arg17[%c0_45, %c0_46] : memref<8x64xf32, #tpu.memory_space<vmem>>, vector<8x64xf32>
    tpu.vector_store %arg17[%c0_45, %c0_46], %83 {strides = array<i32>} : memref<8x64xf32, #tpu.memory_space<vmem>>, vector<8x64xf32>,
    %87 = arith.truncf %83 : vector<8x64xf32> to vector<8x64xbf16>
    %c0_47 = arith.constant 0 : index
    %c0_48 = arith.constant 0 : index
    %88 = vector.load %arg10[%c0_47, %c0_48] : memref<64x256xbf16, #tpu.memory_space<vmem>>, vector<64x256xbf16>
    %cst_49 = arith.constant dense<0.000000e+00> : vector<8x256xf32>
    %89 = tpu.matmul %87, %88, %cst_49 {dimension_numbers = #tpu.dot_dimension_numbers<[1], [0], [0], [1], [0, 0, 1, 1], [], []>} : vector<8x64xbf16>, vector<64x256xbf16>, vector<8x256xf32> -> vector<8x256xf32>
    %c0_50 = arith.constant 0 : index
    %c0_51 = arith.constant 0 : index
    %90 = vector.load %arg11[%c0_50, %c0_51] : memref<3x256xf32, #tpu.memory_space<vmem>>, vector<1x256xf32>
    %91 = vector.broadcast %90 : vector<1x256xf32> to vector<8x256xf32>
    %92 = arith.addf %89, %91 : vector<8x256xf32>
    %cst_52 = arith.constant dense<0.000000e+00> : vector<256xf32>
    %93 = vector.multi_reduction <add>, %92, %cst_52 [0] : vector<8x256xf32> to vector<256xf32>
    %94 = vector.shape_cast %93 : vector<256xf32> to vector<1x256xf32>
    %cst_53 = arith.constant 8.000000e+00 : f32
    %95 = vector.broadcast %cst_53 : f32 to vector<1x256xf32>
    %96 = arith.divf %94, %95 : vector<1x256xf32>
    %97 = vector.broadcast %96 : vector<1x256xf32> to vector<8x256xf32>
    %98 = arith.subf %92, %97 : vector<8x256xf32>
    %99 = arith.mulf %98, %98 : vector<8x256xf32>
    %cst_54 = arith.constant dense<0.000000e+00> : vector<256xf32>
    %100 = vector.multi_reduction <add>, %99, %cst_54 [0] : vector<8x256xf32> to vector<256xf32>
    %101 = vector.shape_cast %100 : vector<256xf32> to vector<1x256xf32>
    %cst_55 = arith.constant 8.000000e+00 : f32
    %102 = vector.broadcast %cst_55 : f32 to vector<1x256xf32>
    %103 = arith.divf %101, %102 : vector<1x256xf32>
    %104 = vector.broadcast %96 : vector<1x256xf32> to vector<8x256xf32>
    %105 = arith.subf %92, %104 : vector<8x256xf32>
    %cst_56 = arith.constant 9.99999974E-6 : f32
    %106 = vector.broadcast %cst_56 : f32 to vector<1x256xf32>
    %107 = arith.addf %103, %106 : vector<1x256xf32>
    %108 = math.rsqrt %107 : vector<1x256xf32>
    %109 = vector.broadcast %108 : vector<1x256xf32> to vector<8x256xf32>
    %110 = arith.mulf %105, %109 : vector<8x256xf32>
    %c1_57 = arith.constant 1 : index
    %c0_58 = arith.constant 0 : index
    %111 = vector.load %arg11[%c1_57, %c0_58] : memref<3x256xf32, #tpu.memory_space<vmem>>, vector<1x256xf32>
    %112 = vector.broadcast %111 : vector<1x256xf32> to vector<8x256xf32>
    %113 = arith.mulf %110, %112 : vector<8x256xf32>
    %c2_59 = arith.constant 2 : index
    %c0_60 = arith.constant 0 : index
    %114 = vector.load %arg11[%c2_59, %c0_60] : memref<3x256xf32, #tpu.memory_space<vmem>>, vector<1x256xf32>
    %115 = vector.broadcast %114 : vector<1x256xf32> to vector<8x256xf32>
    %116 = arith.addf %113, %115 : vector<8x256xf32>
    %cst_61 = arith.constant 0.00999999977 : f32
    %117 = vector.broadcast %cst_61 : f32 to vector<8x256xf32>
    %118 = arith.mulf %117, %116 : vector<8x256xf32>
    %119 = arith.maximumf %116, %118 : vector<8x256xf32>
    %120 = arith.truncf %119 : vector<8x256xf32> to vector<8x256xbf16>
    %c0_62 = arith.constant 0 : index
    %c0_63 = arith.constant 0 : index
    %121 = vector.load %arg12[%c0_62, %c0_63] : memref<256x256xbf16, #tpu.memory_space<vmem>>, vector<256x256xbf16>
    %cst_64 = arith.constant dense<0.000000e+00> : vector<8x256xf32>
    %122 = tpu.matmul %120, %121, %cst_64 {dimension_numbers = #tpu.dot_dimension_numbers<[1], [0], [0], [1], [0, 0, 1, 1], [], []>} : vector<8x256xbf16>, vector<256x256xbf16>, vector<8x256xf32> -> vector<8x256xf32>
    %c0_65 = arith.constant 0 : index
    %c0_66 = arith.constant 0 : index
    %123 = vector.load %arg13[%c0_65, %c0_66] : memref<3x256xf32, #tpu.memory_space<vmem>>, vector<1x256xf32>
    %124 = vector.broadcast %123 : vector<1x256xf32> to vector<8x256xf32>
    %125 = arith.addf %122, %124 : vector<8x256xf32>
    %cst_67 = arith.constant dense<0.000000e+00> : vector<256xf32>
    %126 = vector.multi_reduction <add>, %125, %cst_67 [0] : vector<8x256xf32> to vector<256xf32>
    %127 = vector.shape_cast %126 : vector<256xf32> to vector<1x256xf32>
    %cst_68 = arith.constant 8.000000e+00 : f32
    %128 = vector.broadcast %cst_68 : f32 to vector<1x256xf32>
    %129 = arith.divf %127, %128 : vector<1x256xf32>
    %130 = vector.broadcast %129 : vector<1x256xf32> to vector<8x256xf32>
    %131 = arith.subf %125, %130 : vector<8x256xf32>
    %132 = arith.mulf %131, %131 : vector<8x256xf32>
    %cst_69 = arith.constant dense<0.000000e+00> : vector<256xf32>
    %133 = vector.multi_reduction <add>, %132, %cst_69 [0] : vector<8x256xf32> to vector<256xf32>
    %134 = vector.shape_cast %133 : vector<256xf32> to vector<1x256xf32>
    %cst_70 = arith.constant 8.000000e+00 : f32
    %135 = vector.broadcast %cst_70 : f32 to vector<1x256xf32>
    %136 = arith.divf %134, %135 : vector<1x256xf32>
    %137 = vector.broadcast %129 : vector<1x256xf32> to vector<8x256xf32>
    %138 = arith.subf %125, %137 : vector<8x256xf32>
    %cst_71 = arith.constant 9.99999974E-6 : f32
    %139 = vector.broadcast %cst_71 : f32 to vector<1x256xf32>
    %140 = arith.addf %136, %139 : vector<1x256xf32>
    %141 = math.rsqrt %140 : vector<1x256xf32>
    %142 = vector.broadcast %141 : vector<1x256xf32> to vector<8x256xf32>
    %143 = arith.mulf %138, %142 : vector<8x256xf32>
    %c1_72 = arith.constant 1 : index
    %c0_73 = arith.constant 0 : index
    %144 = vector.load %arg13[%c1_72, %c0_73] : memref<3x256xf32, #tpu.memory_space<vmem>>, vector<1x256xf32>
    %145 = vector.broadcast %144 : vector<1x256xf32> to vector<8x256xf32>
    %146 = arith.mulf %143, %145 : vector<8x256xf32>
    %c2_74 = arith.constant 2 : index
    %c0_75 = arith.constant 0 : index
    %147 = vector.load %arg13[%c2_74, %c0_75] : memref<3x256xf32, #tpu.memory_space<vmem>>, vector<1x256xf32>
    %148 = vector.broadcast %147 : vector<1x256xf32> to vector<8x256xf32>
    %149 = arith.addf %146, %148 : vector<8x256xf32>
    %cst_76 = arith.constant 0.00999999977 : f32
    %150 = vector.broadcast %cst_76 : f32 to vector<8x256xf32>
    %151 = arith.mulf %150, %149 : vector<8x256xf32>
    %152 = arith.maximumf %149, %151 : vector<8x256xf32>
    %153 = arith.truncf %152 : vector<8x256xf32> to vector<8x256xbf16>
    %c0_77 = arith.constant 0 : index
    %c0_78 = arith.constant 0 : index
    %154 = vector.load %arg14[%c0_77, %c0_78] : memref<256x256xbf16, #tpu.memory_space<vmem>>, vector<256x256xbf16>
    %cst_79 = arith.constant dense<0.000000e+00> : vector<8x256xf32>
    %155 = tpu.matmul %153, %154, %cst_79 {dimension_numbers = #tpu.dot_dimension_numbers<[1], [0], [0], [1], [0, 0, 1, 1], [], []>} : vector<8x256xbf16>, vector<256x256xbf16>, vector<8x256xf32> -> vector<8x256xf32>
    %c0_80 = arith.constant 0 : index
    %c0_81 = arith.constant 0 : index
    %156 = vector.load %arg15[%c0_80, %c0_81] : memref<1x256xf32, #tpu.memory_space<vmem>>, vector<1x256xf32>
    %157 = vector.broadcast %156 : vector<1x256xf32> to vector<8x256xf32>
    %158 = arith.addf %155, %157 : vector<8x256xf32>
    %c0_82 = arith.constant 0 : index
    %c0_83 = arith.constant 0 : index
    %159 = vector.load %arg20[%c0_82, %c0_83] : memref<8x256xf32, #tpu.memory_space<vmem>>, vector<8x256xf32>
    tpu.vector_store %arg20[%c0_82, %c0_83], %158 {strides = array<i32>} : memref<8x256xf32, #tpu.memory_space<vmem>>, vector<8x256xf32>,
    %c0_84 = arith.constant 0 : index
    %c0_85 = arith.constant 0 : index
    %160 = vector.load %arg16[%c0_84, %c0_85] : memref<1x256xf32, #tpu.memory_space<vmem>>, vector<1x256xf32>
    %cst_86 = arith.constant -7.000000e+00 : f32
    %161 = vector.broadcast %cst_86 : f32 to vector<1x256xf32>
    %162 = arith.subf %160, %161 : vector<1x256xf32>
    %cst_87 = arith.constant 0.000000e+00 : f32
    %163 = vector.broadcast %cst_87 : f32 to vector<1x256xf32>
    %164 = arith.maximumf %162, %163 : vector<1x256xf32>
    %165 = math.absf %162 : vector<1x256xf32>
    %cst_88 = arith.constant 0.000000e+00 : f32
    %166 = vector.broadcast %cst_88 : f32 to vector<1x256xf32>
    %167 = arith.subf %166, %165 : vector<1x256xf32>
    %168 = math.exp %167 : vector<1x256xf32>
    %cst_89 = arith.constant 1.000000e+00 : f32
    %169 = vector.broadcast %cst_89 : f32 to vector<1x256xf32>
    %170 = arith.addf %169, %168 : vector<1x256xf32>
    %171 = math.log %170 : vector<1x256xf32>
    %172 = arith.addf %164, %171 : vector<1x256xf32>
    %cst_90 = arith.constant -7.000000e+00 : f32
    %173 = vector.broadcast %cst_90 : f32 to vector<1x256xf32>
    %174 = arith.addf %173, %172 : vector<1x256xf32>
    %cst_91 = arith.constant 7.000000e+00 : f32
    %175 = vector.broadcast %cst_91 : f32 to vector<1x256xf32>
    %176 = arith.subf %160, %175 : vector<1x256xf32>
    %cst_92 = arith.constant 0.000000e+00 : f32
    %177 = vector.broadcast %cst_92 : f32 to vector<1x256xf32>
    %178 = arith.maximumf %176, %177 : vector<1x256xf32>
    %179 = math.absf %176 : vector<1x256xf32>
    %cst_93 = arith.constant 0.000000e+00 : f32
    %180 = vector.broadcast %cst_93 : f32 to vector<1x256xf32>
    %181 = arith.subf %180, %179 : vector<1x256xf32>
    %182 = math.exp %181 : vector<1x256xf32>
    %cst_94 = arith.constant 1.000000e+00 : f32
    %183 = vector.broadcast %cst_94 : f32 to vector<1x256xf32>
    %184 = arith.addf %183, %182 : vector<1x256xf32>
    %185 = math.log %184 : vector<1x256xf32>
    %186 = arith.addf %178, %185 : vector<1x256xf32>
    %187 = arith.subf %174, %186 : vector<1x256xf32>
    %cst_95 = arith.constant -2.000000e+00 : f32
    %188 = vector.broadcast %cst_95 : f32 to vector<1x256xf32>
    %189 = arith.mulf %188, %187 : vector<1x256xf32>
    %190 = math.exp %189 : vector<1x256xf32>
    %191 = arith.subf %0, %158 : vector<8x256xf32>
    %cst_96 = arith.constant 5.000000e-01 : f32
    %192 = vector.broadcast %cst_96 : f32 to vector<8x256xf32>
    %193 = arith.mulf %192, %191 : vector<8x256xf32>
    %194 = arith.mulf %193, %191 : vector<8x256xf32>
    %195 = vector.broadcast %190 : vector<1x256xf32> to vector<8x256xf32>
    %196 = arith.mulf %194, %195 : vector<8x256xf32>
    %197 = vector.broadcast %187 : vector<1x256xf32> to vector<8x256xf32>
    %198 = arith.addf %196, %197 : vector<8x256xf32>
    %cst_97 = arith.constant 0.918938517 : f32
    %199 = vector.broadcast %cst_97 : f32 to vector<8x256xf32>
    %200 = arith.addf %198, %199 : vector<8x256xf32>
    %cst_98 = arith.constant dense<0.000000e+00> : vector<8xf32>
    %201 = vector.multi_reduction <add>, %200, %cst_98 [1] : vector<8x256xf32> to vector<8xf32>
    %202 = vector.shape_cast %201 : vector<8xf32> to vector<8x1xf32>
    %cst_99 = arith.constant dense<0.000000e+00> : vector<1xf32>
    %203 = vector.multi_reduction <add>, %202, %cst_99 [0] : vector<8x1xf32> to vector<1xf32>
    %204 = vector.shape_cast %203 : vector<1xf32> to vector<1x1xf32>
    %cst_100 = arith.constant 1.250000e-01 : f32
    %205 = vector.broadcast %cst_100 : f32 to vector<1x1xf32>
    %206 = arith.mulf %204, %205 : vector<1x1xf32>
    %cst_101 = arith.constant 1.000000e+00 : f32
    %207 = vector.broadcast %cst_101 : f32 to vector<8x64xf32>
    %208 = arith.addf %207, %77 : vector<8x64xf32>
    %209 = arith.mulf %72, %72 : vector<8x64xf32>
    %210 = arith.subf %208, %209 : vector<8x64xf32>
    %211 = math.exp %77 : vector<8x64xf32>
    %212 = arith.subf %210, %211 : vector<8x64xf32>
    %cst_102 = arith.constant -5.000000e-01 : f32
    %213 = vector.broadcast %cst_102 : f32 to vector<8x64xf32>
    %214 = arith.mulf %213, %212 : vector<8x64xf32>
    %cst_103 = arith.constant dense<0.000000e+00> : vector<8xf32>
    %215 = vector.multi_reduction <add>, %214, %cst_103 [1] : vector<8x64xf32> to vector<8xf32>
    %216 = vector.shape_cast %215 : vector<8xf32> to vector<8x1xf32>
    %cst_104 = arith.constant dense<0.000000e+00> : vector<1xf32>
    %217 = vector.multi_reduction <add>, %216, %cst_104 [0] : vector<8x1xf32> to vector<1xf32>
    %218 = vector.shape_cast %217 : vector<1xf32> to vector<1x1xf32>
    %cst_105 = arith.constant 1.250000e-01 : f32
    %219 = vector.broadcast %cst_105 : f32 to vector<1x1xf32>
    %220 = arith.mulf %218, %219 : vector<1x1xf32>
    %c0_106 = arith.constant 0 : index
    %c0_107 = arith.constant 0 : index
    %221 = vector.load %arg21[%c0_106, %c0_107] : memref<1x1xf32, #tpu.memory_space<vmem>>, vector<1x1xf32>
    tpu.vector_store %arg21[%c0_106, %c0_107], %206 {strides = array<i32>} : memref<1x1xf32, #tpu.memory_space<vmem>>, vector<1x1xf32>,
    %c0_108 = arith.constant 0 : index
    %c0_109 = arith.constant 0 : index
    %222 = vector.load %arg22[%c0_108, %c0_109] : memref<1x1xf32, #tpu.memory_space<vmem>>, vector<1x1xf32>
    tpu.vector_store %arg22[%c0_108, %c0_109], %220 {strides = array<i32>} : memref<1x1xf32, #tpu.memory_space<vmem>>, vector<1x1xf32>,
    %223 = arith.addf %206, %220 : vector<1x1xf32>
    %c0_110 = arith.constant 0 : index
    %c0_111 = arith.constant 0 : index
    %224 = vector.load %arg23[%c0_110, %c0_111] : memref<1x1xf32, #tpu.memory_space<vmem>>, vector<1x1xf32>
    tpu.vector_store %arg23[%c0_110, %c0_111], %223 {strides = array<i32>} : memref<1x1xf32, #tpu.memory_space<vmem>>, vector<1x1xf32>,
    return
  }
  func.func @transform_0(%arg0: i32) -> (i32, i32) {
    %c0_i32 = arith.constant 0 : i32
    %c0_i32_0 = arith.constant 0 : i32
    %c0_i32_1 = arith.constant 0 : i32
    return %c0_i32, %c0_i32_0 : i32, i32
  }
  func.func @transform_1(%arg0: i32) -> (i32, i32) {
    %c0_i32 = arith.constant 0 : i32
    %c0_i32_0 = arith.constant 0 : i32
    %c0_i32_1 = arith.constant 0 : i32
    return %c0_i32, %c0_i32_0 : i32, i32
  }
  func.func @transform_2(%arg0: i32) -> (i32, i32) {
    %c0_i32 = arith.constant 0 : i32
    %c0_i32_0 = arith.constant 0 : i32
    %c0_i32_1 = arith.constant 0 : i32
    return %c0_i32, %c0_i32_0 : i32, i32
  }
  func.func @transform_3(%arg0: i32) -> (i32, i32) {
    %c0_i32 = arith.constant 0 : i32
    %c0_i32_0 = arith.constant 0 : i32
    %c0_i32_1 = arith.constant 0 : i32
    return %c0_i32, %c0_i32_0 : i32, i32
  }
  func.func @transform_4(%arg0: i32) -> (i32, i32) {
    %c0_i32 = arith.constant 0 : i32
    %c0_i32_0 = arith.constant 0 : i32
    %c0_i32_1 = arith.constant 0 : i32
    return %c0_i32, %c0_i32_0 : i32, i32
  }
  func.func @transform_5(%arg0: i32) -> (i32, i32) {
    %c0_i32 = arith.constant 0 : i32
    %c0_i32_0 = arith.constant 0 : i32
    %c0_i32_1 = arith.constant 0 : i32
    return %c0_i32, %c0_i32_0 : i32, i32
  }
  func.func @transform_6(%arg0: i32) -> (i32, i32) {
    %c0_i32 = arith.constant 0 : i32
    %c0_i32_0 = arith.constant 0 : i32
    %c0_i32_1 = arith.constant 0 : i32
    return %c0_i32, %c0_i32_0 : i32, i32
  }
  func.func @transform_7(%arg0: i32) -> (i32, i32) {
    %c0_i32 = arith.constant 0 : i32
    %c0_i32_0 = arith.constant 0 : i32
    %c0_i32_1 = arith.constant 0 : i32
    return %c0_i32, %c0_i32_0 : i32, i32
  }
  func.func @transform_8(%arg0: i32) -> (i32, i32) {
    %c0_i32 = arith.constant 0 : i32
    %c0_i32_0 = arith.constant 0 : i32
    %c0_i32_1 = arith.constant 0 : i32
    return %c0_i32, %c0_i32_0 : i32, i32
  }
  func.func @transform_9(%arg0: i32) -> (i32, i32) {
    %c0_i32 = arith.constant 0 : i32
    %c0_i32_0 = arith.constant 0 : i32
    %c0_i32_1 = arith.constant 0 : i32
    return %c0_i32, %c0_i32_0 : i32, i32
  }
  func.func @transform_10(%arg0: i32) -> (i32, i32) {
    %c0_i32 = arith.constant 0 : i32
    %c0_i32_0 = arith.constant 0 : i32
    %c0_i32_1 = arith.constant 0 : i32
    return %c0_i32, %c0_i32_0 : i32, i32
  }
  func.func @transform_11(%arg0: i32) -> (i32, i32) {
    %c0_i32 = arith.constant 0 : i32
    %c0_i32_0 = arith.constant 0 : i32
    %c0_i32_1 = arith.constant 0 : i32
    return %c0_i32, %c0_i32_0 : i32, i32
  }
  func.func @transform_12(%arg0: i32) -> (i32, i32) {
    %c0_i32 = arith.constant 0 : i32
    %c0_i32_0 = arith.constant 0 : i32
    %c0_i32_1 = arith.constant 0 : i32
    return %c0_i32, %c0_i32_0 : i32, i32
  }
  func.func @transform_13(%arg0: i32) -> (i32, i32) {
    %c0_i32 = arith.constant 0 : i32
    %c0_i32_0 = arith.constant 0 : i32
    %c0_i32_1 = arith.constant 0 : i32
    return %c0_i32, %c0_i32_0 : i32, i32
  }
  func.func @transform_14(%arg0: i32) -> (i32, i32) {
    %c0_i32 = arith.constant 0 : i32
    %c0_i32_0 = arith.constant 0 : i32
    %c0_i32_1 = arith.constant 0 : i32
    return %c0_i32, %c0_i32_0 : i32, i32
  }
  func.func @transform_15(%arg0: i32) -> (i32, i32) {
    %c0_i32 = arith.constant 0 : i32
    %c0_i32_0 = arith.constant 0 : i32
    %c0_i32_1 = arith.constant 0 : i32
    return %c0_i32, %c0_i32_0 : i32, i32
  }
  func.func @transform_16(%arg0: i32) -> (i32, i32) {
    %c0_i32 = arith.constant 0 : i32
    %c0_i32_0 = arith.constant 0 : i32
    %c0_i32_1 = arith.constant 0 : i32
    return %c0_i32, %c0_i32_0 : i32, i32
  }
  func.func @transform_17(%arg0: i32) -> (i32, i32) {
    %c0_i32 = arith.constant 0 : i32
    %c0_i32_0 = arith.constant 0 : i32
    %c0_i32_1 = arith.constant 0 : i32
    return %c0_i32, %c0_i32_0 : i32, i32
  }
  func.func @transform_18(%arg0: i32) -> (i32, i32) {
    %c0_i32 = arith.constant 0 : i32
    %c0_i32_0 = arith.constant 0 : i32
    %c0_i32_1 = arith.constant 0 : i32
    return %c0_i32, %c0_i32_0 : i32, i32
  }
  func.func @transform_19(%arg0: i32) -> (i32, i32) {
    %c0_i32 = arith.constant 0 : i32
    %c0_i32_0 = arith.constant 0 : i32
    %c0_i32_1 = arith.constant 0 : i32
    return %c0_i32, %c0_i32_0 : i32, i32
  }
  func.func @transform_20(%arg0: i32) -> (i32, i32) {
    %c0_i32 = arith.constant 0 : i32
    %c0_i32_0 = arith.constant 0 : i32
    %c0_i32_1 = arith.constant 0 : i32
    return %c0_i32, %c0_i32_0 : i32, i32
  }
  func.func @transform_21(%arg0: i32) -> (i32, i32) {
    %c0_i32 = arith.constant 0 : i32
    %c0_i32_0 = arith.constant 0 : i32
    %c0_i32_1 = arith.constant 0 : i32
    return %c0_i32, %c0_i32_0 : i32, i32
  }
  func.func @transform_22(%arg0: i32) -> (i32, i32) {
    %c0_i32 = arith.constant 0 : i32
    %c0_i32_0 = arith.constant 0 : i32
    %c0_i32_1 = arith.constant 0 : i32
    return %c0_i32, %c0_i32_0 : i32, i32
  }
}

</mosaic_0001>

<llo_original>
// kernel: vae_type00_forward.1
$region0: #{vae_type00_forward.1}
  #allocation0 [shape = 'u32[]', space=smem, size = 0x4, offset = 0x4, fixed_abs, tag = 'smem constant byte address 0x4 - core index']
  #allocation1 [shape = 'u32[144,128]{1,0:T(1,128)}', space=vmem, size = 0x12000, scoped, tag = 'internal scratch']
  %s0 = inlined_call_operand.vmem [shape: f32[8,256], index: 0, kind: input, shape index: {}]
  %s1 = inlined_call_operand.vmem [shape: f32[8,64], index: 1, kind: input, shape index: {}]
  %s2 = inlined_call_operand.vmem [shape: bf16[256,256], index: 2, kind: input, shape index: {}]
  %s3 = inlined_call_operand.vmem [shape: f32[3,256], index: 3, kind: input, shape index: {}]
  %s4 = inlined_call_operand.vmem [shape: bf16[256,256], index: 4, kind: input, shape index: {}]
  %s5 = inlined_call_operand.vmem [shape: f32[3,256], index: 5, kind: input, shape index: {}]
  %s6 = inlined_call_operand.vmem [shape: bf16[256,64], index: 6, kind: input, shape index: {}]
  %s7 = inlined_call_operand.vmem [shape: bf16[256,64], index: 7, kind: input, shape index: {}]
  %s8 = inlined_call_operand.vmem [shape: f32[2,64], index: 8, kind: input, shape index: {}]
  %s9 = inlined_call_operand.hbm [shape: bf16[64,256], index: 9, kind: input, shape index: {}]
  %s10 = inlined_call_operand.hbm [shape: f32[3,256], index: 10, kind: input, shape index: {}]
  %s11 = inlined_call_operand.hbm [shape: bf16[256,256], index: 11, kind: input, shape index: {}]
  %s12 = inlined_call_operand.hbm [shape: f32[3,256], index: 12, kind: input, shape index: {}]
  %s13 = inlined_call_operand.hbm [shape: bf16[256,256], index: 13, kind: input, shape index: {}]
  %s14 = inlined_call_operand.hbm [shape: f32[1,256], index: 14, kind: input, shape index: {}]
  %s15 = inlined_call_operand.hbm [shape: f32[1,256], index: 15, kind: input, shape index: {}]
  %s16 = inlined_call_operand.hbm [shape: f32[8,64], index: 16, kind: output, shape index: {0}]
  %s17 = inlined_call_operand.hbm [shape: f32[8,64], index: 17, kind: output, shape index: {1}]
  %s18 = inlined_call_operand.hbm [shape: f32[8,64], index: 18, kind: output, shape index: {2}]
  %s19 = inlined_call_operand.hbm [shape: f32[8,256], index: 19, kind: output, shape index: {3}]
  %s20 = inlined_call_operand.hbm [shape: f32[1,1], index: 20, kind: output, shape index: {4}]
  %s21 = inlined_call_operand.hbm [shape: f32[1,1], index: 21, kind: output, shape index: {5}]
  %s22 = inlined_call_operand.hbm [shape: f32[1,1], index: 22, kind: output, shape index: {6}]
  %23 = xla_tuple %s16, %s17, %s18, %s19, %s20, %s21, %s22
  %s24 = sld [smem:[#allocation0]]
  $region150: #{vae_type00_forward.1} parent=0
    _
  %s26 = ssub.s32 1, %s24
  %s27 = scalar_select 0, %s26, %s24
  $region1: #{vae_type00_forward.1} parent=0
    #allocation2 [shape = 'u8[32768]{0}', space=vmem, size = 0x8000, scoped, tag = 'input window, operand 9, single buffered']
    #allocation3 [shape = 's32[1]{0}', space=sflag, size = 0x4, scoped, tag = 'scoped memory for vae_type00_forward.1']
    #allocation4 [shape = 's32[1]{0}', space=sflag, size = 0x4, scoped, tag = 'scoped memory for vae_type00_forward.1']
    #allocation5 [shape = 'u8[4096]{0}', space=vmem, size = 0x1000, scoped, tag = 'input window, operand 10, single buffered']
    #allocation6 [shape = 's32[1]{0}', space=sflag, size = 0x4, scoped, tag = 'scoped memory for vae_type00_forward.1']
    #allocation7 [shape = 'u8[131072]{0}', space=vmem, size = 0x20000, scoped, tag = 'input window, operand 11, single buffered']
    #allocation8 [shape = 'u8[4096]{0}', space=vmem, size = 0x1000, scoped, tag = 'input window, operand 12, single buffered']
    #allocation9 [shape = 's32[1]{0}', space=sflag, size = 0x4, scoped, tag = 'scoped memory for vae_type00_forward.1']
    #allocation10 [shape = 'u8[131072]{0}', space=vmem, size = 0x20000, scoped, tag = 'input window, operand 13, single buffered']
    #allocation11 [shape = 'u8[1024]{0}', space=vmem, size = 0x400, scoped, tag = 'input window, operand 14, single buffered']
    #allocation12 [shape = 's32[1]{0}', space=sflag, size = 0x4, scoped, tag = 'scoped memory for vae_type00_forward.1']
    #allocation13 [shape = 'u8[1024]{0}', space=vmem, size = 0x400, scoped, tag = 'input window, operand 15, single buffered']
    #allocation14 [shape = 'u8[4096]{0}', space=vmem, size = 0x1000, scoped, tag = 'output window, operand 0, single buffered']
    #allocation15 [shape = 'u8[4096]{0}', space=vmem, size = 0x1000, scoped, tag = 'output window, operand 1, single buffered']
    #allocation16 [shape = 's32[1]{0}', space=sflag, size = 0x4, scoped, tag = 'scoped memory for vae_type00_forward.1']
    #allocation17 [shape = 'u8[4096]{0}', space=vmem, size = 0x1000, scoped, tag = 'output window, operand 2, single buffered']
    #allocation18 [shape = 'u8[8192]{0}', space=vmem, size = 0x2000, scoped, tag = 'output window, operand 3, single buffered']
    #allocation19 [shape = 's32[1]{0}', space=sflag, size = 0x4, scoped, tag = 'scoped memory for vae_type00_forward.1']
    #allocation20 [shape = 'u8[512]{0}', space=vmem, size = 0x400, scoped, tag = 'output window, operand 4, single buffered']
    #allocation21 [shape = 'u8[512]{0}', space=vmem, size = 0x400, scoped, tag = 'output window, operand 5, single buffered']
    #allocation22 [shape = 's32[1]{0}', space=sflag, size = 0x4, scoped, tag = 'scoped memory for vae_type00_forward.1']
    #allocation23 [shape = 'u8[512]{0}', space=vmem, size = 0x400, scoped, tag = 'output window, operand 6, single buffered']
    %28 = vsyncpa [#allocation3], 0
    %29 = vsyncpa [#allocation6], 0
    %30 = vsyncpa [#allocation9], 0
    %31 = vsyncpa [#allocation12], 0
    %32 = vsyncpa [#allocation4], 0
    %33 = vsyncpa [#allocation16], 0
    %34 = vsyncpa [#allocation19], 0
    %35 = vsyncpa [#allocation22], 0
    // Predicated region
    $region2: #{vae_type00_forward.1} parent=1 // pred_check
      _
    $region3: #{vae_type00_forward.1} parent=1 // pred_check_branch
      %37 = sbr.rel (0) target = $region5
    $region4: #{vae_type00_forward.1} parent=1 // pred_region
      _
    $region5: #{vae_type00_forward.1} parent=1 // pred_fallthru
      _
    // Predicated region
    $region6: #{vae_type00_forward.1} parent=1 // pred_check
      _
    $region7: #{vae_type00_forward.1} parent=1 // pred_check_branch
      %39 = sbr.rel (0) target = $region9
    $region8: #{vae_type00_forward.1} parent=1 // pred_region
      _
    $region9: #{vae_type00_forward.1} parent=1 // pred_fallthru
      _
    // Predicated region
    $region10: #{vae_type00_forward.1} parent=1 // pred_check
      _
    $region11: #{vae_type00_forward.1} parent=1 // pred_check_branch
      %41 = sbr.rel (0) target = $region13
    $region12: #{vae_type00_forward.1} parent=1 // pred_region
      _
    $region13: #{vae_type00_forward.1} parent=1 // pred_fallthru
      _
    // Predicated region
    $region14: #{vae_type00_forward.1} parent=1 // pred_check
      _
    $region15: #{vae_type00_forward.1} parent=1 // pred_check_branch
      %43 = sbr.rel (0) target = $region17
    $region16: #{vae_type00_forward.1} parent=1 // pred_region
      _
    $region17: #{vae_type00_forward.1} parent=1 // pred_fallthru
      _
    // Predicated region
    $region18: #{vae_type00_forward.1} parent=1 // pred_check
      _
    $region19: #{vae_type00_forward.1} parent=1 // pred_check_branch
      %45 = sbr.rel (0) target = $region21
    $region20: #{vae_type00_forward.1} parent=1 // pred_region
      _
    $region21: #{vae_type00_forward.1} parent=1 // pred_fallthru
      _
    // Predicated region
    $region22: #{vae_type00_forward.1} parent=1 // pred_check
      _
    $region23: #{vae_type00_forward.1} parent=1 // pred_check_branch
      %47 = sbr.rel (0) target = $region25
    $region24: #{vae_type00_forward.1} parent=1 // pred_region
      _
    $region25: #{vae_type00_forward.1} parent=1 // pred_fallthru
      _
    // Predicated region
    $region26: #{vae_type00_forward.1} parent=1 // pred_check
      _
    $region27: #{vae_type00_forward.1} parent=1 // pred_check_branch
      %49 = sbr.rel (0) target = $region29
    $region28: #{vae_type00_forward.1} parent=1 // pred_region
      _
    $region29: #{vae_type00_forward.1} parent=1 // pred_fallthru
      _
    // Predicated region
    $region30: #{vae_type00_forward.1} parent=1 // pred_check
      _
    $region31: #{vae_type00_forward.1} parent=1 // pred_check_branch
      %51 = sbr.rel (0) target = $region33
    $region32: #{vae_type00_forward.1} parent=1 // pred_region
      _
    $region33: #{vae_type00_forward.1} parent=1 // pred_fallthru
      _
    // Predicated region
    $region34: #{vae_type00_forward.1} parent=1 // pred_check
      _
    $region35: #{vae_type00_forward.1} parent=1 // pred_check_branch
      %53 = sbr.rel (0) target = $region37
    $region36: #{vae_type00_forward.1} parent=1 // pred_region
      _
    $region37: #{vae_type00_forward.1} parent=1 // pred_fallthru
      _
    // Predicated region
    $region38: #{vae_type00_forward.1} parent=1 // pred_check
      _
    $region39: #{vae_type00_forward.1} parent=1 // pred_check_branch
      %55 = sbr.rel (0) target = $region41
    $region40: #{vae_type00_forward.1} parent=1 // pred_region
      %s57 = ssub.s32 1024, 1024
      %58 = vsyncadd [#allocation3], %s57
      %s59 = sshll.u32 [#allocation2], 4
      %s60 = int_to_ptr.vmem [resolvable:$true] %s59
      %65 = dma.hbm_to_vmem [thread:$0]  %s9, 1024, %s60, [#allocation3], 128, 128, 8
    $region41: #{vae_type00_forward.1} parent=1 // pred_fallthru
      _
    // Predicated region
    $region42: #{vae_type00_forward.1} parent=1 // pred_check
      _
    $region43: #{vae_type00_forward.1} parent=1 // pred_check_branch
      %67 = sbr.rel (0) target = $region45
    $region44: #{vae_type00_forward.1} parent=1 // pred_region
      %s69 = ssub.s32 128, 128
      %70 = vsyncadd [#allocation6], %s69
      %s72 = sshll.u32 [#allocation5], 4
      %s73 = int_to_ptr.vmem [resolvable:$true] %s72
      %75 = dma.hbm_to_vmem [thread:$0]  %s10, 128, %s73, [#allocation6]
    $region45: #{vae_type00_forward.1} parent=1 // pred_fallthru
      _
    // Predicated region
    $region46: #{vae_type00_forward.1} parent=1 // pred_check
      _
    $region47: #{vae_type00_forward.1} parent=1 // pred_check_branch
      %77 = sbr.rel (0) target = $region49
    $region48: #{vae_type00_forward.1} parent=1 // pred_region
      %s79 = ssub.s32 4096, 4096
      %80 = vsyncadd [#allocation6], %s79
      %s81 = sshll.u32 [#allocation7], 4
      %s82 = int_to_ptr.vmem [resolvable:$true] %s81
      %87 = dma.hbm_to_vmem [thread:$0]  %s11, 4096, %s82, [#allocation6], 128, 128, 8
    $region49: #{vae_type00_forward.1} parent=1 // pred_fallthru
      _
    // Predicated region
    $region50: #{vae_type00_forward.1} parent=1 // pred_check
      _
    $region51: #{vae_type00_forward.1} parent=1 // pred_check_branch
      %89 = sbr.rel (0) target = $region53
    $region52: #{vae_type00_forward.1} parent=1 // pred_region
      %s91 = ssub.s32 128, 128
      %92 = vsyncadd [#allocation9], %s91
      %s94 = sshll.u32 [#allocation8], 4
      %s95 = int_to_ptr.vmem [resolvable:$true] %s94
      %97 = dma.hbm_to_vmem [thread:$0]  %s12, 128, %s95, [#allocation9]
    $region53: #{vae_type00_forward.1} parent=1 // pred_fallthru
      _
    // Predicated region
    $region54: #{vae_type00_forward.1} parent=1 // pred_check
      _
    $region55: #{vae_type00_forward.1} parent=1 // pred_check_branch
      %99 = sbr.rel (0) target = $region57
    $region56: #{vae_type00_forward.1} parent=1 // pred_region
      %s101 = ssub.s32 4096, 4096
      %102 = vsyncadd [#allocation9], %s101
      %s103 = sshll.u32 [#allocation10], 4
      %s104 = int_to_ptr.vmem [resolvable:$true] %s103
      %109 = dma.hbm_to_vmem [thread:$0]  %s13, 4096, %s104, [#allocation9], 128, 128, 8
    $region57: #{vae_type00_forward.1} parent=1 // pred_fallthru
      _
    // Predicated region
    $region58: #{vae_type00_forward.1} parent=1 // pred_check
      _
    $region59: #{vae_type00_forward.1} parent=1 // pred_check_branch
      %111 = sbr.rel (0) target = $region61
    $region60: #{vae_type00_forward.1} parent=1 // pred_region
      %s113 = ssub.s32 32, 32
      %114 = vsyncadd [#allocation12], %s113
      %s116 = sshll.u32 [#allocation11], 4
      %s117 = int_to_ptr.vmem [resolvable:$true] %s116
      %119 = dma.hbm_to_vmem [thread:$0]  %s14, 32, %s117, [#allocation12]
    $region61: #{vae_type00_forward.1} parent=1 // pred_fallthru
      _
    // Predicated region
    $region62: #{vae_type00_forward.1} parent=1 // pred_check
      _
    $region63: #{vae_type00_forward.1} parent=1 // pred_check_branch
      %121 = sbr.rel (0) target = $region65
    $region64: #{vae_type00_forward.1} parent=1 // pred_region
      %s123 = ssub.s32 32, 32
      %124 = vsyncadd [#allocation12], %s123
      %s126 = sshll.u32 [#allocation13], 4
      %s127 = int_to_ptr.vmem [resolvable:$true] %s126
      %129 = dma.hbm_to_vmem [thread:$0]  %s15, 32, %s127, [#allocation12]
    $region65: #{vae_type00_forward.1} parent=1 // pred_fallthru
      _
    // Predicated region
    $region66: #{vae_type00_forward.1} parent=1 // pred_check
      _
    $region67: #{vae_type00_forward.1} parent=1 // pred_check_branch
      %131 = sbr.rel (0) target = $region69
    $region68: #{vae_type00_forward.1} parent=1 // pred_region
      %132 = dma.done [#allocation3], 1024
    $region69: #{vae_type00_forward.1} parent=1 // pred_fallthru
      _
    // Predicated region
    $region70: #{vae_type00_forward.1} parent=1 // pred_check
      _
    $region71: #{vae_type00_forward.1} parent=1 // pred_check_branch
      %134 = sbr.rel (0) target = $region73
    $region72: #{vae_type00_forward.1} parent=1 // pred_region
      %135 = dma.done [#allocation6], 128
    $region73: #{vae_type00_forward.1} parent=1 // pred_fallthru
      _
    // Predicated region
    $region74: #{vae_type00_forward.1} parent=1 // pred_check
      _
    $region75: #{vae_type00_forward.1} parent=1 // pred_check_branch
      %137 = sbr.rel (0) target = $region77
    $region76: #{vae_type00_forward.1} parent=1 // pred_region
      %138 = dma.done [#allocation6], 4096
    $region77: #{vae_type00_forward.1} parent=1 // pred_fallthru
      _
    // Predicated region
    $region78: #{vae_type00_forward.1} parent=1 // pred_check
      _
    $region79: #{vae_type00_forward.1} parent=1 // pred_check_branch
      %140 = sbr.rel (0) target = $region81
    $region80: #{vae_type00_forward.1} parent=1 // pred_region
      %141 = dma.done [#allocation9], 128
    $region81: #{vae_type00_forward.1} parent=1 // pred_fallthru
      _
    // Predicated region
    $region82: #{vae_type00_forward.1} parent=1 // pred_check
      _
    $region83: #{vae_type00_forward.1} parent=1 // pred_check_branch
      %143 = sbr.rel (0) target = $region85
    $region84: #{vae_type00_forward.1} parent=1 // pred_region
      %144 = dma.done [#allocation9], 4096
    $region85: #{vae_type00_forward.1} parent=1 // pred_fallthru
      _
    // Predicated region
    $region86: #{vae_type00_forward.1} parent=1 // pred_check
      _
    $region87: #{vae_type00_forward.1} parent=1 // pred_check_branch
      %146 = sbr.rel (0) target = $region89
    $region88: #{vae_type00_forward.1} parent=1 // pred_region
      %147 = dma.done [#allocation12], 32
    $region89: #{vae_type00_forward.1} parent=1 // pred_fallthru
      _
    // Predicated region
    $region90: #{vae_type00_forward.1} parent=1 // pred_check
      _
    $region91: #{vae_type00_forward.1} parent=1 // pred_check_branch
      %149 = sbr.rel (0) target = $region93
    $region92: #{vae_type00_forward.1} parent=1 // pred_region
      %150 = dma.done [#allocation12], 32
    $region93: #{vae_type00_forward.1} parent=1 // pred_fallthru
      _
    %v152 = vld [vmem:[%s0] sm:$0xff]
    %v153 = vld [vmem:[%s0 + $0x8] sm:$0xff]
    %v154 = vpack.c.bf16 %v152, %v152
    %v155 = vpack.c.bf16 %v153, %v153
    %v156 = vld [vmem:[%s2] sm:$0xff]
    %v157 = vld [vmem:[%s2 + $0x8] sm:$0xff]
    %v158 = vld [vmem:[%s2 + $0x10] sm:$0xff]
    %v159 = vld [vmem:[%s2 + $0x18] sm:$0xff]
    %v160 = vld [vmem:[%s2 + $0x20] sm:$0xff]
    %v161 = vld [vmem:[%s2 + $0x28] sm:$0xff]
    %v162 = vld [vmem:[%s2 + $0x30] sm:$0xff]
    %v163 = vld [vmem:[%s2 + $0x38] sm:$0xff]
    %v164 = vld [vmem:[%s2 + $0x40] sm:$0xff]
    %v165 = vld [vmem:[%s2 + $0x48] sm:$0xff]
    %v166 = vld [vmem:[%s2 + $0x50] sm:$0xff]
    %v167 = vld [vmem:[%s2 + $0x58] sm:$0xff]
    %v168 = vld [vmem:[%s2 + $0x60] sm:$0xff]
    %v169 = vld [vmem:[%s2 + $0x68] sm:$0xff]
    %v170 = vld [vmem:[%s2 + $0x70] sm:$0xff]
    %v171 = vld [vmem:[%s2 + $0x78] sm:$0xff]
    %v172 = vld [vmem:[%s2 + $0x80] sm:$0xff]
    %v173 = vld [vmem:[%s2 + $0x88] sm:$0xff]
    %v174 = vld [vmem:[%s2 + $0x90] sm:$0xff]
    %v175 = vld [vmem:[%s2 + $0x98] sm:$0xff]
    %v176 = vld [vmem:[%s2 + $0xa0] sm:$0xff]
    %v177 = vld [vmem:[%s2 + $0xa8] sm:$0xff]
    %v178 = vld [vmem:[%s2 + $0xb0] sm:$0xff]
    %v179 = vld [vmem:[%s2 + $0xb8] sm:$0xff]
    %v180 = vld [vmem:[%s2 + $0xc0] sm:$0xff]
    %v181 = vld [vmem:[%s2 + $0xc8] sm:$0xff]
    %v182 = vld [vmem:[%s2 + $0xd0] sm:$0xff]
    %v183 = vld [vmem:[%s2 + $0xd8] sm:$0xff]
    %v184 = vld [vmem:[%s2 + $0xe0] sm:$0xff]
    %v185 = vld [vmem:[%s2 + $0xe8] sm:$0xff]
    %v186 = vld [vmem:[%s2 + $0xf0] sm:$0xff]
    %v187 = vld [vmem:[%s2 + $0xf8] sm:$0xff]
    %v188 = vld [vmem:[%s3] ss:$4 sm:$0x3]
    %v190 = vlaneseq
    %v191 = vshrl.u32 %v190, 7
    %v192 = vsub.s32 0, %v191
    %v193 = vrot.slane %v188, %v192
    %v194 = vlaneseq
    %v195 = vshrl.u32 %v194, 7
    %v196 = vsub.s32 1, %v195
    %v197 = vrot.slane %v188, %v196
    %v232 = vunpack.c.l.b16 %v156
    %v233 = vunpack.c.h.b16 %v156
    %v234 = vunpack.c.l.b16 %v157
    %v235 = vunpack.c.h.b16 %v157
    %v236 = vunpack.c.l.b16 %v158
    %v237 = vunpack.c.h.b16 %v158
    %v238 = vunpack.c.l.b16 %v159
    %v239 = vunpack.c.h.b16 %v159
    %v240 = vunpack.c.l.b16 %v160
    %v241 = vunpack.c.h.b16 %v160
    %v242 = vunpack.c.l.b16 %v161
    %v243 = vunpack.c.h.b16 %v161
    %v244 = vunpack.c.l.b16 %v162
    %v245 = vunpack.c.h.b16 %v162
    %v246 = vunpack.c.l.b16 %v163
    %v247 = vunpack.c.h.b16 %v163
    %v248 = vunpack.c.l.b16 %v164
    %v249 = vunpack.c.h.b16 %v164
    %v250 = vunpack.c.l.b16 %v165
    %v251 = vunpack.c.h.b16 %v165
    %v252 = vunpack.c.l.b16 %v166
    %v253 = vunpack.c.h.b16 %v166
    %v254 = vunpack.c.l.b16 %v167
    %v255 = vunpack.c.h.b16 %v167
    %v256 = vunpack.c.l.b16 %v168
    %v257 = vunpack.c.h.b16 %v168
    %v258 = vunpack.c.l.b16 %v169
    %v259 = vunpack.c.h.b16 %v169
    %v260 = vunpack.c.l.b16 %v170
    %v261 = vunpack.c.h.b16 %v170
    %v262 = vunpack.c.l.b16 %v171
    %v263 = vunpack.c.h.b16 %v171
    %v264 = vunpack.c.l.b16 %v172
    %v265 = vunpack.c.h.b16 %v172
    %v266 = vunpack.c.l.b16 %v173
    %v267 = vunpack.c.h.b16 %v173
    %v268 = vunpack.c.l.b16 %v174
    %v269 = vunpack.c.h.b16 %v174
    %v270 = vunpack.c.l.b16 %v175
    %v271 = vunpack.c.h.b16 %v175
    %v272 = vunpack.c.l.b16 %v176
    %v273 = vunpack.c.h.b16 %v176
    %v274 = vunpack.c.l.b16 %v177
    %v275 = vunpack.c.h.b16 %v177
    %v276 = vunpack.c.l.b16 %v178
    %v277 = vunpack.c.h.b16 %v178
    %v278 = vunpack.c.l.b16 %v179
    %v279 = vunpack.c.h.b16 %v179
    %v280 = vunpack.c.l.b16 %v180
    %v281 = vunpack.c.h.b16 %v180
    %v282 = vunpack.c.l.b16 %v181
    %v283 = vunpack.c.h.b16 %v181
    %v284 = vunpack.c.l.b16 %v182
    %v285 = vunpack.c.h.b16 %v182
    %v286 = vunpack.c.l.b16 %v183
    %v287 = vunpack.c.h.b16 %v183
    %v288 = vunpack.c.l.b16 %v184
    %v289 = vunpack.c.h.b16 %v184
    %v290 = vunpack.c.l.b16 %v185
    %v291 = vunpack.c.h.b16 %v185
    %v292 = vunpack.c.l.b16 %v186
    %v293 = vunpack.c.h.b16 %v186
    %v294 = vunpack.c.l.b16 %v187
    %v295 = vunpack.c.h.b16 %v187
    %v296 = vpack.c.b16 %v234, %v232
    %v297 = vpack.c.b16 %v235, %v233
    %v298 = vpack.c.b16 %v238, %v236
    %v299 = vpack.c.b16 %v239, %v237
    %v300 = vpack.c.b16 %v242, %v240
    %v301 = vpack.c.b16 %v243, %v241
    %v302 = vpack.c.b16 %v246, %v244
    %v303 = vpack.c.b16 %v247, %v245
    %v304 = vpack.c.b16 %v250, %v248
    %v305 = vpack.c.b16 %v251, %v249
    %v306 = vpack.c.b16 %v254, %v252
    %v307 = vpack.c.b16 %v255, %v253
    %v308 = vpack.c.b16 %v258, %v256
    %v309 = vpack.c.b16 %v259, %v257
    %v310 = vpack.c.b16 %v262, %v260
    %v311 = vpack.c.b16 %v263, %v261
    %v312 = vpack.c.b16 %v266, %v264
    %v313 = vpack.c.b16 %v267, %v265
    %v314 = vpack.c.b16 %v270, %v268
    %v315 = vpack.c.b16 %v271, %v269
    %v316 = vpack.c.b16 %v274, %v272
    %v317 = vpack.c.b16 %v275, %v273
    %v318 = vpack.c.b16 %v278, %v276
    %v319 = vpack.c.b16 %v279, %v277
    %v320 = vpack.c.b16 %v282, %v280
    %v321 = vpack.c.b16 %v283, %v281
    %v322 = vpack.c.b16 %v286, %v284
    %v323 = vpack.c.b16 %v287, %v285
    %v324 = vpack.c.b16 %v290, %v288
    %v325 = vpack.c.b16 %v291, %v289
    %v326 = vpack.c.b16 %v294, %v292
    %v327 = vpack.c.b16 %v295, %v293
    %360 = vmatprep.subr.bf16.mxu0 %v297
    %361 = vmatpush1.bf16.msra.mxu0 %v296
    %362 = vmatprep.subr.bf16.mxu0 %v299
    %363 = vmatpush1.bf16.msra.mxu0 %v298
    %364 = vmatprep.subr.bf16.mxu0 %v301
    %365 = vmatpush1.bf16.msra.mxu0 %v300
    %366 = vmatprep.subr.bf16.mxu0 %v303
    %367 = vmatpush1.bf16.msra.mxu0 %v302
    %368 = vmatprep.subr.bf16.mxu0 %v305
    %369 = vmatpush1.bf16.msra.mxu0 %v304
    %370 = vmatprep.subr.bf16.mxu0 %v307
    %371 = vmatpush1.bf16.msra.mxu0 %v306
    %372 = vmatprep.subr.bf16.mxu0 %v309
    %373 = vmatpush1.bf16.msra.mxu0 %v308
    %374 = vmatprep.subr.bf16.mxu0 %v311
    %375 = vmatpush1.bf16.msra.mxu0 %v310
    %376 = vmatprep.subr.bf16.mxu0 %v313
    %377 = vmatpush1.bf16.msra.mxu0 %v312
    %378 = vmatprep.subr.bf16.mxu0 %v315
    %379 = vmatpush1.bf16.msra.mxu0 %v314
    %380 = vmatprep.subr.bf16.mxu0 %v317
    %381 = vmatpush1.bf16.msra.mxu0 %v316
    %382 = vmatprep.subr.bf16.mxu0 %v319
    %383 = vmatpush1.bf16.msra.mxu0 %v318
    %384 = vmatprep.subr.bf16.mxu0 %v321
    %385 = vmatpush1.bf16.msra.mxu0 %v320
    %386 = vmatprep.subr.bf16.mxu0 %v323
    %387 = vmatpush1.bf16.msra.mxu0 %v322
    %388 = vmatprep.subr.bf16.mxu0 %v325
    %389 = vmatpush1.bf16.msra.mxu0 %v324
    %390 = vmatprep.subr.bf16.mxu0 %v327
    %391 = vmatpush1.bf16.msra.mxu0 %v326
    %392 = vmatprep.mubr.bf16.mxu0 %v155
    %393 = vmatmul.mubr.bf16.gmra.mrb[0].mxu0 %v154
    %v394 = vpop.f32.mrb[0].mxu0
    %v395 = vadd.f32 %v193, %v394
    %v396 = vpop.f32.mrb[0].mxu0
    %v397 = vadd.f32 %v197, %v396
    %v398 = vpop.f32.mrb[0].mxu0
    %v399 = vpop.f32.mrb[0].mxu0
    %400 = vdwg.mxu0
    %v401 = vrot.slane %v395, 4
    %v402 = vadd.f32 %v395, %v401
    %v403 = vrot.slane %v402, 2
    %v404 = vadd.f32 %v402, %v403
    %v405 = vrot.slane %v404, 1
    %v406 = vadd.f32 %v404, %v405
    %v407 = vrot.slane %v397, 4
    %v408 = vadd.f32 %v397, %v407
    %v409 = vrot.slane %v408, 2
    %v410 = vadd.f32 %v408, %v409
    %v411 = vrot.slane %v410, 1
    %v412 = vadd.f32 %v410, %v411
    %v413 = vrcp.pop 8.0
    %v414 = vmul.f32 %v406, %v413
    %v415 = vmul.f32 %v412, %v413
    %v416 = vsub.f32 %v395, %v414
    %v417 = vsub.f32 %v397, %v415
    %v418 = vmul.f32 %v416, %v416
    %v419 = vmul.f32 %v417, %v417
    %v420 = vrot.slane %v418, 4
    %v421 = vadd.f32 %v418, %v420
    %v422 = vrot.slane %v421, 2
    %v423 = vadd.f32 %v421, %v422
    %v424 = vrot.slane %v423, 1
    %v425 = vadd.f32 %v423, %v424
    %v426 = vrot.slane %v419, 4
    %v427 = vadd.f32 %v419, %v426
    %v428 = vrot.slane %v427, 2
    %v429 = vadd.f32 %v427, %v428
    %v430 = vrot.slane %v429, 1
    %v431 = vadd.f32 %v429, %v430
    %v432 = vmul.f32 %v425, %v413
    %v433 = vmul.f32 %v431, %v413
    %v434 = vadd.f32 %v432, 1e-05
    %v435 = vadd.f32 %v433, 1e-05
    %v436 = vrsqrt.pop %v434
    %v437 = vrsqrt.pop %v435
    %v438 = vmul.f32 %v416, %v436
    %v439 = vmul.f32 %v417, %v437
    %s440 = scalar_lea.vmem %s3, 1
    %v441 = vld [vmem:[%s440] ss:$4 sm:$0x3]
    %v443 = vlaneseq
    %v444 = vshrl.u32 %v443, 7
    %v445 = vsub.s32 0, %v444
    %v446 = vrot.slane %v441, %v445
    %v447 = vlaneseq
    %v448 = vshrl.u32 %v447, 7
    %v449 = vsub.s32 1, %v448
    %v450 = vrot.slane %v441, %v449
    %v453 = vmul.f32 %v438, %v446
    %v454 = vmul.f32 %v439, %v450
    %s455 = scalar_lea.vmem %s3, 2
    %v456 = vld [vmem:[%s455] ss:$4 sm:$0x3]
    %v458 = vlaneseq
    %v459 = vshrl.u32 %v458, 7
    %v460 = vsub.s32 0, %v459
    %v461 = vrot.slane %v456, %v460
    %v462 = vlaneseq
    %v463 = vshrl.u32 %v462, 7
    %v464 = vsub.s32 1, %v463
    %v465 = vrot.slane %v456, %v464
    %v468 = vadd.f32 %v453, %v461
    %v469 = vadd.f32 %v454, %v465
    %v470 = vmul.f32 %v468, 0.01
    %v471 = vmul.f32 %v469, 0.01
    %v472 = vmax.f32 %v468, %v470
    %v473 = vmax.f32 %v469, %v471
    %v474 = vpack.c.bf16 %v472, %v472
    %v475 = vpack.c.bf16 %v473, %v473
    %v476 = vld [vmem:[%s4] sm:$0xff]
    %v477 = vld [vmem:[%s4 + $0x8] sm:$0xff]
    %v478 = vld [vmem:[%s4 + $0x10] sm:$0xff]
    %v479 = vld [vmem:[%s4 + $0x18] sm:$0xff]
    %v480 = vld [vmem:[%s4 + $0x20] sm:$0xff]
    %v481 = vld [vmem:[%s4 + $0x28] sm:$0xff]
    %v482 = vld [vmem:[%s4 + $0x30] sm:$0xff]
    %v483 = vld [vmem:[%s4 + $0x38] sm:$0xff]
    %v484 = vld [vmem:[%s4 + $0x40] sm:$0xff]
    %v485 = vld [vmem:[%s4 + $0x48] sm:$0xff]
    %v486 = vld [vmem:[%s4 + $0x50] sm:$0xff]
    %v487 = vld [vmem:[%s4 + $0x58] sm:$0xff]
    %v488 = vld [vmem:[%s4 + $0x60] sm:$0xff]
    %v489 = vld [vmem:[%s4 + $0x68] sm:$0xff]
    %v490 = vld [vmem:[%s4 + $0x70] sm:$0xff]
    %v491 = vld [vmem:[%s4 + $0x78] sm:$0xff]
    %v492 = vld [vmem:[%s4 + $0x80] sm:$0xff]
    %v493 = vld [vmem:[%s4 + $0x88] sm:$0xff]
    %v494 = vld [vmem:[%s4 + $0x90] sm:$0xff]
    %v495 = vld [vmem:[%s4 + $0x98] sm:$0xff]
    %v496 = vld [vmem:[%s4 + $0xa0] sm:$0xff]
    %v497 = vld [vmem:[%s4 + $0xa8] sm:$0xff]
    %v498 = vld [vmem:[%s4 + $0xb0] sm:$0xff]
    %v499 = vld [vmem:[%s4 + $0xb8] sm:$0xff]
    %v500 = vld [vmem:[%s4 + $0xc0] sm:$0xff]
    %v501 = vld [vmem:[%s4 + $0xc8] sm:$0xff]
    %v502 = vld [vmem:[%s4 + $0xd0] sm:$0xff]
    %v503 = vld [vmem:[%s4 + $0xd8] sm:$0xff]
    %v504 = vld [vmem:[%s4 + $0xe0] sm:$0xff]
    %v505 = vld [vmem:[%s4 + $0xe8] sm:$0xff]
    %v506 = vld [vmem:[%s4 + $0xf0] sm:$0xff]
    %v507 = vld [vmem:[%s4 + $0xf8] sm:$0xff]
    %v508 = vld [vmem:[%s5] ss:$4 sm:$0x3]
    %v510 = vlaneseq
    %v511 = vshrl.u32 %v510, 7
    %v512 = vsub.s32 0, %v511
    %v513 = vrot.slane %v508, %v512
    %v514 = vlaneseq
    %v515 = vshrl.u32 %v514, 7
    %v516 = vsub.s32 1, %v515
    %v517 = vrot.slane %v508, %v516
    %v552 = vunpack.c.l.b16 %v476
    %v553 = vunpack.c.h.b16 %v476
    %v554 = vunpack.c.l.b16 %v477
    %v555 = vunpack.c.h.b16 %v477
    %v556 = vunpack.c.l.b16 %v478
    %v557 = vunpack.c.h.b16 %v478
    %v558 = vunpack.c.l.b16 %v479
    %v559 = vunpack.c.h.b16 %v479
    %v560 = vunpack.c.l.b16 %v480
    %v561 = vunpack.c.h.b16 %v480
    %v562 = vunpack.c.l.b16 %v481
    %v563 = vunpack.c.h.b16 %v481
    %v564 = vunpack.c.l.b16 %v482
    %v565 = vunpack.c.h.b16 %v482
    %v566 = vunpack.c.l.b16 %v483
    %v567 = vunpack.c.h.b16 %v483
    %v568 = vunpack.c.l.b16 %v484
    %v569 = vunpack.c.h.b16 %v484
    %v570 = vunpack.c.l.b16 %v485
    %v571 = vunpack.c.h.b16 %v485
    %v572 = vunpack.c.l.b16 %v486
    %v573 = vunpack.c.h.b16 %v486
    %v574 = vunpack.c.l.b16 %v487
    %v575 = vunpack.c.h.b16 %v487
    %v576 = vunpack.c.l.b16 %v488
    %v577 = vunpack.c.h.b16 %v488
    %v578 = vunpack.c.l.b16 %v489
    %v579 = vunpack.c.h.b16 %v489
    %v580 = vunpack.c.l.b16 %v490
    %v581 = vunpack.c.h.b16 %v490
    %v582 = vunpack.c.l.b16 %v491
    %v583 = vunpack.c.h.b16 %v491
    %v584 = vunpack.c.l.b16 %v492
    %v585 = vunpack.c.h.b16 %v492
    %v586 = vunpack.c.l.b16 %v493
    %v587 = vunpack.c.h.b16 %v493
    %v588 = vunpack.c.l.b16 %v494
    %v589 = vunpack.c.h.b16 %v494
    %v590 = vunpack.c.l.b16 %v495
    %v591 = vunpack.c.h.b16 %v495
    %v592 = vunpack.c.l.b16 %v496
    %v593 = vunpack.c.h.b16 %v496
    %v594 = vunpack.c.l.b16 %v497
    %v595 = vunpack.c.h.b16 %v497
    %v596 = vunpack.c.l.b16 %v498
    %v597 = vunpack.c.h.b16 %v498
    %v598 = vunpack.c.l.b16 %v499
    %v599 = vunpack.c.h.b16 %v499
    %v600 = vunpack.c.l.b16 %v500
    %v601 = vunpack.c.h.b16 %v500
    %v602 = vunpack.c.l.b16 %v501
    %v603 = vunpack.c.h.b16 %v501
    %v604 = vunpack.c.l.b16 %v502
    %v605 = vunpack.c.h.b16 %v502
    %v606 = vunpack.c.l.b16 %v503
    %v607 = vunpack.c.h.b16 %v503
    %v608 = vunpack.c.l.b16 %v504
    %v609 = vunpack.c.h.b16 %v504
    %v610 = vunpack.c.l.b16 %v505
    %v611 = vunpack.c.h.b16 %v505
    %v612 = vunpack.c.l.b16 %v506
    %v613 = vunpack.c.h.b16 %v506
    %v614 = vunpack.c.l.b16 %v507
    %v615 = vunpack.c.h.b16 %v507
    %v616 = vpack.c.b16 %v554, %v552
    %v617 = vpack.c.b16 %v555, %v553
    %v618 = vpack.c.b16 %v558, %v556
    %v619 = vpack.c.b16 %v559, %v557
    %v620 = vpack.c.b16 %v562, %v560
    %v621 = vpack.c.b16 %v563, %v561
    %v622 = vpack.c.b16 %v566, %v564
    %v623 = vpack.c.b16 %v567, %v565
    %v624 = vpack.c.b16 %v570, %v568
    %v625 = vpack.c.b16 %v571, %v569
    %v626 = vpack.c.b16 %v574, %v572
    %v627 = vpack.c.b16 %v575, %v573
    %v628 = vpack.c.b16 %v578, %v576
    %v629 = vpack.c.b16 %v579, %v577
    %v630 = vpack.c.b16 %v582, %v580
    %v631 = vpack.c.b16 %v583, %v581
    %v632 = vpack.c.b16 %v586, %v584
    %v633 = vpack.c.b16 %v587, %v585
    %v634 = vpack.c.b16 %v590, %v588
    %v635 = vpack.c.b16 %v591, %v589
    %v636 = vpack.c.b16 %v594, %v592
    %v637 = vpack.c.b16 %v595, %v593
    %v638 = vpack.c.b16 %v598, %v596
    %v639 = vpack.c.b16 %v599, %v597
    %v640 = vpack.c.b16 %v602, %v600
    %v641 = vpack.c.b16 %v603, %v601
    %v642 = vpack.c.b16 %v606, %v604
    %v643 = vpack.c.b16 %v607, %v605
    %v644 = vpack.c.b16 %v610, %v608
    %v645 = vpack.c.b16 %v611, %v609
    %v646 = vpack.c.b16 %v614, %v612
    %v647 = vpack.c.b16 %v615, %v613
    %680 = vmatprep.subr.bf16.mxu0 %v617
    %681 = vmatpush1.bf16.msra.mxu0 %v616
    %682 = vmatprep.subr.bf16.mxu0 %v619
    %683 = vmatpush1.bf16.msra.mxu0 %v618
    %684 = vmatprep.subr.bf16.mxu0 %v621
    %685 = vmatpush1.bf16.msra.mxu0 %v620
    %686 = vmatprep.subr.bf16.mxu0 %v623
    %687 = vmatpush1.bf16.msra.mxu0 %v622
    %688 = vmatprep.subr.bf16.mxu0 %v625
    %689 = vmatpush1.bf16.msra.mxu0 %v624
    %690 = vmatprep.subr.bf16.mxu0 %v627
    %691 = vmatpush1.bf16.msra.mxu0 %v626
    %692 = vmatprep.subr.bf16.mxu0 %v629
    %693 = vmatpush1.bf16.msra.mxu0 %v628
    %694 = vmatprep.subr.bf16.mxu0 %v631
    %695 = vmatpush1.bf16.msra.mxu0 %v630
    %696 = vmatprep.subr.bf16.mxu0 %v633
    %697 = vmatpush1.bf16.msra.mxu0 %v632
    %698 = vmatprep.subr.bf16.mxu0 %v635
    %699 = vmatpush1.bf16.msra.mxu0 %v634
    %700 = vmatprep.subr.bf16.mxu0 %v637
    %701 = vmatpush1.bf16.msra.mxu0 %v636
    %702 = vmatprep.subr.bf16.mxu0 %v639
    %703 = vmatpush1.bf16.msra.mxu0 %v638
    %704 = vmatprep.subr.bf16.mxu0 %v641
    %705 = vmatpush1.bf16.msra.mxu0 %v640
    %706 = vmatprep.subr.bf16.mxu0 %v643
    %707 = vmatpush1.bf16.msra.mxu0 %v642
    %708 = vmatprep.subr.bf16.mxu0 %v645
    %709 = vmatpush1.bf16.msra.mxu0 %v644
    %710 = vmatprep.subr.bf16.mxu0 %v647
    %711 = vmatpush1.bf16.msra.mxu0 %v646
    %712 = vmatprep.mubr.bf16.mxu0 %v475
    %713 = vmatmul.mubr.bf16.gmra.mrb[0].mxu0 %v474
    %v714 = vpop.f32.mrb[0].mxu0
    %v715 = vadd.f32 %v513, %v714
    %v716 = vpop.f32.mrb[0].mxu0
    %v717 = vadd.f32 %v517, %v716
    %v718 = vpop.f32.mrb[0].mxu0
    %v719 = vpop.f32.mrb[0].mxu0
    %720 = vdwg.mxu0
    %v721 = vrot.slane %v715, 4
    %v722 = vadd.f32 %v715, %v721
    %v723 = vrot.slane %v722, 2
    %v724 = vadd.f32 %v722, %v723
    %v725 = vrot.slane %v724, 1
    %v726 = vadd.f32 %v724, %v725
    %v727 = vrot.slane %v717, 4
    %v728 = vadd.f32 %v717, %v727
    %v729 = vrot.slane %v728, 2
    %v730 = vadd.f32 %v728, %v729
    %v731 = vrot.slane %v730, 1
    %v732 = vadd.f32 %v730, %v731
    %v733 = vmul.f32 %v726, %v413
    %v734 = vmul.f32 %v732, %v413
    %v735 = vsub.f32 %v715, %v733
    %v736 = vsub.f32 %v717, %v734
    %v737 = vmul.f32 %v735, %v735
    %v738 = vmul.f32 %v736, %v736
    %v739 = vrot.slane %v737, 4
    %v740 = vadd.f32 %v737, %v739
    %v741 = vrot.slane %v740, 2
    %v742 = vadd.f32 %v740, %v741
    %v743 = vrot.slane %v742, 1
    %v744 = vadd.f32 %v742, %v743
    %v745 = vrot.slane %v738, 4
    %v746 = vadd.f32 %v738, %v745
    %v747 = vrot.slane %v746, 2
    %v748 = vadd.f32 %v746, %v747
    %v749 = vrot.slane %v748, 1
    %v750 = vadd.f32 %v748, %v749
    %v751 = vmul.f32 %v744, %v413
    %v752 = vmul.f32 %v750, %v413
    %v753 = vadd.f32 %v751, 1e-05
    %v754 = vadd.f32 %v752, 1e-05
    %v755 = vrsqrt.pop %v753
    %v756 = vrsqrt.pop %v754
    %v757 = vmul.f32 %v735, %v755
    %v758 = vmul.f32 %v736, %v756
    %s759 = scalar_lea.vmem %s5, 1
    %v760 = vld [vmem:[%s759] ss:$4 sm:$0x3]
    %v762 = vlaneseq
    %v763 = vshrl.u32 %v762, 7
    %v764 = vsub.s32 0, %v763
    %v765 = vrot.slane %v760, %v764
    %v766 = vlaneseq
    %v767 = vshrl.u32 %v766, 7
    %v768 = vsub.s32 1, %v767
    %v769 = vrot.slane %v760, %v768
    %v772 = vmul.f32 %v757, %v765
    %v773 = vmul.f32 %v758, %v769
    %s774 = scalar_lea.vmem %s5, 2
    %v775 = vld [vmem:[%s774] ss:$4 sm:$0x3]
    %v777 = vlaneseq
    %v778 = vshrl.u32 %v777, 7
    %v779 = vsub.s32 0, %v778
    %v780 = vrot.slane %v775, %v779
    %v781 = vlaneseq
    %v782 = vshrl.u32 %v781, 7
    %v783 = vsub.s32 1, %v782
    %v784 = vrot.slane %v775, %v783
    %v787 = vadd.f32 %v772, %v780
    %v788 = vadd.f32 %v773, %v784
    %v789 = vmul.f32 %v787, 0.01
    %v790 = vmul.f32 %v788, 0.01
    %v791 = vmax.f32 %v787, %v789
    %v792 = vmax.f32 %v788, %v790
    %v793 = vpack.c.bf16 %v791, %v791
    %v794 = vpack.c.bf16 %v792, %v792
    %v795 = vld [vmem:[%s6] sm:$0xf]
    %v796 = vld [vmem:[%s6 + $0x4] sm:$0xf]
    %v797 = vld [vmem:[%s6 + $0x8] sm:$0xf]
    %v798 = vld [vmem:[%s6 + $0xc] sm:$0xf]
    %v799 = vld [vmem:[%s6 + $0x10] sm:$0xf]
    %v800 = vld [vmem:[%s6 + $0x14] sm:$0xf]
    %v801 = vld [vmem:[%s6 + $0x18] sm:$0xf]
    %v802 = vld [vmem:[%s6 + $0x1c] sm:$0xf]
    %v803 = vld [vmem:[%s6 + $0x20] sm:$0xf]
    %v804 = vld [vmem:[%s6 + $0x24] sm:$0xf]
    %v805 = vld [vmem:[%s6 + $0x28] sm:$0xf]
    %v806 = vld [vmem:[%s6 + $0x2c] sm:$0xf]
    %v807 = vld [vmem:[%s6 + $0x30] sm:$0xf]
    %v808 = vld [vmem:[%s6 + $0x34] sm:$0xf]
    %v809 = vld [vmem:[%s6 + $0x38] sm:$0xf]
    %v810 = vld [vmem:[%s6 + $0x3c] sm:$0xf]
    %v811 = vld [vmem:[%s6 + $0x40] sm:$0xf]
    %v812 = vld [vmem:[%s6 + $0x44] sm:$0xf]
    %v813 = vld [vmem:[%s6 + $0x48] sm:$0xf]
    %v814 = vld [vmem:[%s6 + $0x4c] sm:$0xf]
    %v815 = vld [vmem:[%s6 + $0x50] sm:$0xf]
    %v816 = vld [vmem:[%s6 + $0x54] sm:$0xf]
    %v817 = vld [vmem:[%s6 + $0x58] sm:$0xf]
    %v818 = vld [vmem:[%s6 + $0x5c] sm:$0xf]
    %v819 = vld [vmem:[%s6 + $0x60] sm:$0xf]
    %v820 = vld [vmem:[%s6 + $0x64] sm:$0xf]
    %v821 = vld [vmem:[%s6 + $0x68] sm:$0xf]
    %v822 = vld [vmem:[%s6 + $0x6c] sm:$0xf]
    %v823 = vld [vmem:[%s6 + $0x70] sm:$0xf]
    %v824 = vld [vmem:[%s6 + $0x74] sm:$0xf]
    %v825 = vld [vmem:[%s6 + $0x78] sm:$0xf]
    %v826 = vld [vmem:[%s6 + $0x7c] sm:$0xf]
    %v827 = vld [vmem:[%s8] sm:$0x1]
    %v828 = vlaneseq
    %v829 = vshrl.u32 %v828, 7
    %v830 = vsub.s32 0, %v829
    %v831 = vrot.slane %v827, %v830
    %v864 = vunpack.c.l.b16 %v795
    %v865 = vunpack.c.l.b16 %v796
    %v866 = vunpack.c.l.b16 %v797
    %v867 = vunpack.c.l.b16 %v798
    %v868 = vunpack.c.l.b16 %v799
    %v869 = vunpack.c.l.b16 %v800
    %v870 = vunpack.c.l.b16 %v801
    %v871 = vunpack.c.l.b16 %v802
    %v872 = vunpack.c.l.b16 %v803
    %v873 = vunpack.c.l.b16 %v804
    %v874 = vunpack.c.l.b16 %v805
    %v875 = vunpack.c.l.b16 %v806
    %v876 = vunpack.c.l.b16 %v807
    %v877 = vunpack.c.l.b16 %v808
    %v878 = vunpack.c.l.b16 %v809
    %v879 = vunpack.c.l.b16 %v810
    %v880 = vunpack.c.l.b16 %v811
    %v881 = vunpack.c.l.b16 %v812
    %v882 = vunpack.c.l.b16 %v813
    %v883 = vunpack.c.l.b16 %v814
    %v884 = vunpack.c.l.b16 %v815
    %v885 = vunpack.c.l.b16 %v816
    %v886 = vunpack.c.l.b16 %v817
    %v887 = vunpack.c.l.b16 %v818
    %v888 = vunpack.c.l.b16 %v819
    %v889 = vunpack.c.l.b16 %v820
    %v890 = vunpack.c.l.b16 %v821
    %v891 = vunpack.c.l.b16 %v822
    %v892 = vunpack.c.l.b16 %v823
    %v893 = vunpack.c.l.b16 %v824
    %v894 = vunpack.c.l.b16 %v825
    %v895 = vunpack.c.l.b16 %v826
    %v896 = vpack.c.b16 %v865, %v864
    %v897 = vpack.c.b16 %v867, %v866
    %v898 = vpack.c.b16 %v869, %v868
    %v899 = vpack.c.b16 %v871, %v870
    %v900 = vpack.c.b16 %v873, %v872
    %v901 = vpack.c.b16 %v875, %v874
    %v902 = vpack.c.b16 %v877, %v876
    %v903 = vpack.c.b16 %v879, %v878
    %v904 = vpack.c.b16 %v881, %v880
    %v905 = vpack.c.b16 %v883, %v882
    %v906 = vpack.c.b16 %v885, %v884
    %v907 = vpack.c.b16 %v887, %v886
    %v908 = vpack.c.b16 %v889, %v888
    %v909 = vpack.c.b16 %v891, %v890
    %v910 = vpack.c.b16 %v893, %v892
    %v911 = vpack.c.b16 %v895, %v894
    %928 = vmatprep.subr.bf16.mxu0 0
    %929 = vmatpush1.bf16.msra.mxu0 %v896
    %930 = vmatprep.subr.bf16.mxu0 0
    %931 = vmatpush1.bf16.msra.mxu0 %v897
    %932 = vmatprep.subr.bf16.mxu0 0
    %933 = vmatpush1.bf16.msra.mxu0 %v898
    %934 = vmatprep.subr.bf16.mxu0 0
    %935 = vmatpush1.bf16.msra.mxu0 %v899
    %936 = vmatprep.subr.bf16.mxu0 0
    %937 = vmatpush1.bf16.msra.mxu0 %v900
    %938 = vmatprep.subr.bf16.mxu0 0
    %939 = vmatpush1.bf16.msra.mxu0 %v901
    %940 = vmatprep.subr.bf16.mxu0 0
    %941 = vmatpush1.bf16.msra.mxu0 %v902
    %942 = vmatprep.subr.bf16.mxu0 0
    %943 = vmatpush1.bf16.msra.mxu0 %v903
    %944 = vmatprep.subr.bf16.mxu0 0
    %945 = vmatpush1.bf16.msra.mxu0 %v904
    %946 = vmatprep.subr.bf16.mxu0 0
    %947 = vmatpush1.bf16.msra.mxu0 %v905
    %948 = vmatprep.subr.bf16.mxu0 0
    %949 = vmatpush1.bf16.msra.mxu0 %v906
    %950 = vmatprep.subr.bf16.mxu0 0
    %951 = vmatpush1.bf16.msra.mxu0 %v907
    %952 = vmatprep.subr.bf16.mxu0 0
    %953 = vmatpush1.bf16.msra.mxu0 %v908
    %954 = vmatprep.subr.bf16.mxu0 0
    %955 = vmatpush1.bf16.msra.mxu0 %v909
    %956 = vmatprep.subr.bf16.mxu0 0
    %957 = vmatpush1.bf16.msra.mxu0 %v910
    %958 = vmatprep.subr.bf16.mxu0 0
    %959 = vmatpush1.bf16.msra.mxu0 %v911
    %960 = vmatprep.mubr.bf16.mxu0 %v794
    %961 = vmatmul.mubr.bf16.gmra.mrb[0].mxu0 %v793
    %v962 = vpop.f32.mrb[0].mxu0
    %v963 = vadd.f32 %v831, %v962
    %v964 = vpop.f32.mrb[0].mxu0
    %v965 = vpop.f32.mrb[0].mxu0
    %v966 = vpop.f32.mrb[0].mxu0
    %967 = vdwg.mxu0
    %v968 = vld [vmem:[%s7] sm:$0xf]
    %v969 = vld [vmem:[%s7 + $0x4] sm:$0xf]
    %v970 = vld [vmem:[%s7 + $0x8] sm:$0xf]
    %v971 = vld [vmem:[%s7 + $0xc] sm:$0xf]
    %v972 = vld [vmem:[%s7 + $0x10] sm:$0xf]
    %v973 = vld [vmem:[%s7 + $0x14] sm:$0xf]
    %v974 = vld [vmem:[%s7 + $0x18] sm:$0xf]
    %v975 = vld [vmem:[%s7 + $0x1c] sm:$0xf]
    %v976 = vld [vmem:[%s7 + $0x20] sm:$0xf]
    %v977 = vld [vmem:[%s7 + $0x24] sm:$0xf]
    %v978 = vld [vmem:[%s7 + $0x28] sm:$0xf]
    %v979 = vld [vmem:[%s7 + $0x2c] sm:$0xf]
    %v980 = vld [vmem:[%s7 + $0x30] sm:$0xf]
    %v981 = vld [vmem:[%s7 + $0x34] sm:$0xf]
    %v982 = vld [vmem:[%s7 + $0x38] sm:$0xf]
    %v983 = vld [vmem:[%s7 + $0x3c] sm:$0xf]
    %v984 = vld [vmem:[%s7 + $0x40] sm:$0xf]
    %v985 = vld [vmem:[%s7 + $0x44] sm:$0xf]
    %v986 = vld [vmem:[%s7 + $0x48] sm:$0xf]
    %v987 = vld [vmem:[%s7 + $0x4c] sm:$0xf]
    %v988 = vld [vmem:[%s7 + $0x50] sm:$0xf]
    %v989 = vld [vmem:[%s7 + $0x54] sm:$0xf]
    %v990 = vld [vmem:[%s7 + $0x58] sm:$0xf]
    %v991 = vld [vmem:[%s7 + $0x5c] sm:$0xf]
    %v992 = vld [vmem:[%s7 + $0x60] sm:$0xf]
    %v993 = vld [vmem:[%s7 + $0x64] sm:$0xf]
    %v994 = vld [vmem:[%s7 + $0x68] sm:$0xf]
    %v995 = vld [vmem:[%s7 + $0x6c] sm:$0xf]
    %v996 = vld [vmem:[%s7 + $0x70] sm:$0xf]
    %v997 = vld [vmem:[%s7 + $0x74] sm:$0xf]
    %v998 = vld [vmem:[%s7 + $0x78] sm:$0xf]
    %v999 = vld [vmem:[%s7 + $0x7c] sm:$0xf]
    %v1000 = vld [vmem:[%s8 + $0x1] sm:$0x1]
    %v1001 = vlaneseq
    %v1002 = vshrl.u32 %v1001, 7
    %v1003 = vsub.s32 0, %v1002
    %v1004 = vrot.slane %v1000, %v1003
    %v1037 = vunpack.c.l.b16 %v968
    %v1038 = vunpack.c.l.b16 %v969
    %v1039 = vunpack.c.l.b16 %v970
    %v1040 = vunpack.c.l.b16 %v971
    %v1041 = vunpack.c.l.b16 %v972
    %v1042 = vunpack.c.l.b16 %v973
    %v1043 = vunpack.c.l.b16 %v974
    %v1044 = vunpack.c.l.b16 %v975
    %v1045 = vunpack.c.l.b16 %v976
    %v1046 = vunpack.c.l.b16 %v977
    %v1047 = vunpack.c.l.b16 %v978
    %v1048 = vunpack.c.l.b16 %v979
    %v1049 = vunpack.c.l.b16 %v980
    %v1050 = vunpack.c.l.b16 %v981
    %v1051 = vunpack.c.l.b16 %v982
    %v1052 = vunpack.c.l.b16 %v983
    %v1053 = vunpack.c.l.b16 %v984
    %v1054 = vunpack.c.l.b16 %v985
    %v1055 = vunpack.c.l.b16 %v986
    %v1056 = vunpack.c.l.b16 %v987
    %v1057 = vunpack.c.l.b16 %v988
    %v1058 = vunpack.c.l.b16 %v989
    %v1059 = vunpack.c.l.b16 %v990
    %v1060 = vunpack.c.l.b16 %v991
    %v1061 = vunpack.c.l.b16 %v992
    %v1062 = vunpack.c.l.b16 %v993
    %v1063 = vunpack.c.l.b16 %v994
    %v1064 = vunpack.c.l.b16 %v995
    %v1065 = vunpack.c.l.b16 %v996
    %v1066 = vunpack.c.l.b16 %v997
    %v1067 = vunpack.c.l.b16 %v998
    %v1068 = vunpack.c.l.b16 %v999
    %v1069 = vpack.c.b16 %v1038, %v1037
    %v1070 = vpack.c.b16 %v1040, %v1039
    %v1071 = vpack.c.b16 %v1042, %v1041
    %v1072 = vpack.c.b16 %v1044, %v1043
    %v1073 = vpack.c.b16 %v1046, %v1045
    %v1074 = vpack.c.b16 %v1048, %v1047
    %v1075 = vpack.c.b16 %v1050, %v1049
    %v1076 = vpack.c.b16 %v1052, %v1051
    %v1077 = vpack.c.b16 %v1054, %v1053
    %v1078 = vpack.c.b16 %v1056, %v1055
    %v1079 = vpack.c.b16 %v1058, %v1057
    %v1080 = vpack.c.b16 %v1060, %v1059
    %v1081 = vpack.c.b16 %v1062, %v1061
    %v1082 = vpack.c.b16 %v1064, %v1063
    %v1083 = vpack.c.b16 %v1066, %v1065
    %v1084 = vpack.c.b16 %v1068, %v1067
    %1101 = vmatprep.subr.bf16.mxu0 0
    %1102 = vmatpush1.bf16.msra.mxu0 %v1069
    %1103 = vmatprep.subr.bf16.mxu0 0
    %1104 = vmatpush1.bf16.msra.mxu0 %v1070
    %1105 = vmatprep.subr.bf16.mxu0 0
    %1106 = vmatpush1.bf16.msra.mxu0 %v1071
    %1107 = vmatprep.subr.bf16.mxu0 0
    %1108 = vmatpush1.bf16.msra.mxu0 %v1072
    %1109 = vmatprep.subr.bf16.mxu0 0
    %1110 = vmatpush1.bf16.msra.mxu0 %v1073
    %1111 = vmatprep.subr.bf16.mxu0 0
    %1112 = vmatpush1.bf16.msra.mxu0 %v1074
    %1113 = vmatprep.subr.bf16.mxu0 0
    %1114 = vmatpush1.bf16.msra.mxu0 %v1075
    %1115 = vmatprep.subr.bf16.mxu0 0
    %1116 = vmatpush1.bf16.msra.mxu0 %v1076
    %1117 = vmatprep.subr.bf16.mxu0 0
    %1118 = vmatpush1.bf16.msra.mxu0 %v1077
    %1119 = vmatprep.subr.bf16.mxu0 0
    %1120 = vmatpush1.bf16.msra.mxu0 %v1078
    %1121 = vmatprep.subr.bf16.mxu0 0
    %1122 = vmatpush1.bf16.msra.mxu0 %v1079
    %1123 = vmatprep.subr.bf16.mxu0 0
    %1124 = vmatpush1.bf16.msra.mxu0 %v1080
    %1125 = vmatprep.subr.bf16.mxu0 0
    %1126 = vmatpush1.bf16.msra.mxu0 %v1081
    %1127 = vmatprep.subr.bf16.mxu0 0
    %1128 = vmatpush1.bf16.msra.mxu0 %v1082
    %1129 = vmatprep.subr.bf16.mxu0 0
    %1130 = vmatpush1.bf16.msra.mxu0 %v1083
    %1131 = vmatprep.subr.bf16.mxu0 0
    %1132 = vmatpush1.bf16.msra.mxu0 %v1084
    %1133 = vmatprep.mubr.bf16.mxu0 %v794
    %1134 = vmatmul.mubr.bf16.gmra.mrb[0].mxu0 %v793
    %v1135 = vpop.f32.mrb[0].mxu0
    %v1136 = vadd.f32 %v1004, %v1135
    %v1137 = vpop.f32.mrb[0].mxu0
    %v1138 = vpop.f32.mrb[0].mxu0
    %v1139 = vpop.f32.mrb[0].mxu0
    %1140 = vdwg.mxu0
    %v1141 = vmul.f32 %v1136, 0.5
    %v1142 = vmul.f32 %v1141, 1.442695
    %v1143 = vpow.pop %v1142
    %v1144 = vld [vmem:[%s1] sm:$0xff]
    %v1145 = vmul.f32 %v1143, %v1144
    %v1146 = vadd.f32 %v963, %v1145
    %vm1147 = vcmask 523264
    %1148 = vst.msk [vmem:[#allocation15] sm:$0xff] %vm1147, %v963
    %1149 = vst.msk [vmem:[#allocation17] sm:$0xff] %vm1147, %v1136
    %1150 = vst.msk [vmem:[#allocation14] sm:$0xff] %vm1147, %v1146
    %v1151 = vpack.c.bf16 %v1146, %v1146
    %v1152 = vld [vmem:[#allocation2] sm:$0xff]
    %v1153 = vld [vmem:[#allocation2 + $0x8] sm:$0xff]
    %v1154 = vld [vmem:[#allocation2 + $0x10] sm:$0xff]
    %v1155 = vld [vmem:[#allocation2 + $0x18] sm:$0xff]
    %v1156 = vld [vmem:[#allocation2 + $0x20] sm:$0xff]
    %v1157 = vld [vmem:[#allocation2 + $0x28] sm:$0xff]
    %v1158 = vld [vmem:[#allocation2 + $0x30] sm:$0xff]
    %v1159 = vld [vmem:[#allocation2 + $0x38] sm:$0xff]
    %v1160 = vld [vmem:[#allocation5] ss:$4 sm:$0x3]
    %v1162 = vlaneseq
    %v1163 = vshrl.u32 %v1162, 7
    %v1164 = vsub.s32 0, %v1163
    %v1165 = vrot.slane %v1160, %v1164
    %v1166 = vlaneseq
    %v1167 = vshrl.u32 %v1166, 7
    %v1168 = vsub.s32 1, %v1167
    %v1169 = vrot.slane %v1160, %v1168
    %v1180 = vunpack.c.l.b16 %v1152
    %v1181 = vunpack.c.h.b16 %v1152
    %v1182 = vunpack.c.l.b16 %v1153
    %v1183 = vunpack.c.h.b16 %v1153
    %v1184 = vunpack.c.l.b16 %v1154
    %v1185 = vunpack.c.h.b16 %v1154
    %v1186 = vunpack.c.l.b16 %v1155
    %v1187 = vunpack.c.h.b16 %v1155
    %v1188 = vunpack.c.l.b16 %v1156
    %v1189 = vunpack.c.h.b16 %v1156
    %v1190 = vunpack.c.l.b16 %v1157
    %v1191 = vunpack.c.h.b16 %v1157
    %v1192 = vunpack.c.l.b16 %v1158
    %v1193 = vunpack.c.h.b16 %v1158
    %v1194 = vunpack.c.l.b16 %v1159
    %v1195 = vunpack.c.h.b16 %v1159
    %v1196 = vpack.c.b16 %v1182, %v1180
    %v1197 = vpack.c.b16 %v1183, %v1181
    %v1198 = vpack.c.b16 %v1186, %v1184
    %v1199 = vpack.c.b16 %v1187, %v1185
    %v1200 = vpack.c.b16 %v1190, %v1188
    %v1201 = vpack.c.b16 %v1191, %v1189
    %v1202 = vpack.c.b16 %v1194, %v1192
    %v1203 = vpack.c.b16 %v1195, %v1193
    %v1213 = vsel %vm1147, %v1151, 0
    %1215 = vmatprep.subr.bf16.mxu0 %v1197
    %1216 = vmatpush1.bf16.msra.mxu0 %v1196
    %1217 = vmatprep.subr.bf16.mxu0 %v1199
    %1218 = vmatpush1.bf16.msra.mxu0 %v1198
    %1219 = vmatprep.subr.bf16.mxu0 %v1201
    %1220 = vmatpush1.bf16.msra.mxu0 %v1200
    %1221 = vmatprep.subr.bf16.mxu0 %v1203
    %1222 = vmatpush1.bf16.msra.mxu0 %v1202
    %1223 = vmatprep.subr.bf16.mxu0 0
    %1224 = vmatpush1.bf16.msra.mxu0 0
    %1225 = vmatprep.subr.bf16.mxu0 0
    %1226 = vmatpush1.bf16.msra.mxu0 0
    %1227 = vmatprep.subr.bf16.mxu0 0
    %1228 = vmatpush1.bf16.msra.mxu0 0
    %1229 = vmatprep.subr.bf16.mxu0 0
    %1230 = vmatpush1.bf16.msra.mxu0 0
    %1231 = vmatprep.subr.bf16.mxu0 0
    %1232 = vmatpush1.bf16.msra.mxu0 0
    %1233 = vmatprep.subr.bf16.mxu0 0
    %1234 = vmatpush1.bf16.msra.mxu0 0
    %1235 = vmatprep.subr.bf16.mxu0 0
    %1236 = vmatpush1.bf16.msra.mxu0 0
    %1237 = vmatprep.subr.bf16.mxu0 0
    %1238 = vmatpush1.bf16.msra.mxu0 0
    %1239 = vmatprep.subr.bf16.mxu0 0
    %1240 = vmatpush1.bf16.msra.mxu0 0
    %1241 = vmatprep.subr.bf16.mxu0 0
    %1242 = vmatpush1.bf16.msra.mxu0 0
    %1243 = vmatprep.subr.bf16.mxu0 0
    %1244 = vmatpush1.bf16.msra.mxu0 0
    %1245 = vmatprep.subr.bf16.mxu0 0
    %1246 = vmatpush1.bf16.msra.mxu0 0
    %1247 = vmatprep.mubr.bf16.mxu0 0
    %1248 = vmatmul.mubr.bf16.gmra.mrb[0].mxu0 %v1213
    %v1249 = vpop.f32.mrb[0].mxu0
    %v1250 = vadd.f32 %v1165, %v1249
    %v1251 = vpop.f32.mrb[0].mxu0
    %v1252 = vadd.f32 %v1169, %v1251
    %v1253 = vpop.f32.mrb[0].mxu0
    %v1254 = vpop.f32.mrb[0].mxu0
    %1255 = vdwg.mxu0
    %v1256 = vrot.slane %v1250, 4
    %v1257 = vadd.f32 %v1250, %v1256
    %v1258 = vrot.slane %v1257, 2
    %v1259 = vadd.f32 %v1257, %v1258
    %v1260 = vrot.slane %v1259, 1
    %v1261 = vadd.f32 %v1259, %v1260
    %v1262 = vrot.slane %v1252, 4
    %v1263 = vadd.f32 %v1252, %v1262
    %v1264 = vrot.slane %v1263, 2
    %v1265 = vadd.f32 %v1263, %v1264
    %v1266 = vrot.slane %v1265, 1
    %v1267 = vadd.f32 %v1265, %v1266
    %v1268 = vmul.f32 %v1261, %v413
    %v1269 = vmul.f32 %v1267, %v413
    %v1270 = vsub.f32 %v1250, %v1268
    %v1271 = vsub.f32 %v1252, %v1269
    %v1272 = vmul.f32 %v1270, %v1270
    %v1273 = vmul.f32 %v1271, %v1271
    %v1274 = vrot.slane %v1272, 4
    %v1275 = vadd.f32 %v1272, %v1274
    %v1276 = vrot.slane %v1275, 2
    %v1277 = vadd.f32 %v1275, %v1276
    %v1278 = vrot.slane %v1277, 1
    %v1279 = vadd.f32 %v1277, %v1278
    %v1280 = vrot.slane %v1273, 4
    %v1281 = vadd.f32 %v1273, %v1280
    %v1282 = vrot.slane %v1281, 2
    %v1283 = vadd.f32 %v1281, %v1282
    %v1284 = vrot.slane %v1283, 1
    %v1285 = vadd.f32 %v1283, %v1284
    %v1286 = vmul.f32 %v1279, %v413
    %v1287 = vmul.f32 %v1285, %v413
    %v1288 = vadd.f32 %v1286, 1e-05
    %v1289 = vadd.f32 %v1287, 1e-05
    %v1290 = vrsqrt.pop %v1288
    %v1291 = vrsqrt.pop %v1289
    %v1292 = vmul.f32 %v1270, %v1290
    %v1293 = vmul.f32 %v1271, %v1291
    %s1294 = scalar_lea.vmem [#allocation5], 1
    %v1295 = vld [vmem:[%s1294] ss:$4 sm:$0x3]
    %v1297 = vlaneseq
    %v1298 = vshrl.u32 %v1297, 7
    %v1299 = vsub.s32 0, %v1298
    %v1300 = vrot.slane %v1295, %v1299
    %v1301 = vlaneseq
    %v1302 = vshrl.u32 %v1301, 7
    %v1303 = vsub.s32 1, %v1302
    %v1304 = vrot.slane %v1295, %v1303
    %v1307 = vmul.f32 %v1292, %v1300
    %v1308 = vmul.f32 %v1293, %v1304
    %s1309 = scalar_lea.vmem [#allocation5], 2
    %v1310 = vld [vmem:[%s1309] ss:$4 sm:$0x3]
    %v1312 = vlaneseq
    %v1313 = vshrl.u32 %v1312, 7
    %v1314 = vsub.s32 0, %v1313
    %v1315 = vrot.slane %v1310, %v1314
    %v1316 = vlaneseq
    %v1317 = vshrl.u32 %v1316, 7
    %v1318 = vsub.s32 1, %v1317
    %v1319 = vrot.slane %v1310, %v1318
    %v1322 = vadd.f32 %v1307, %v1315
    %v1323 = vadd.f32 %v1308, %v1319
    %v1324 = vmul.f32 %v1322, 0.01
    %v1325 = vmul.f32 %v1323, 0.01
    %v1326 = vmax.f32 %v1322, %v1324
    %v1327 = vmax.f32 %v1323, %v1325
    %v1328 = vpack.c.bf16 %v1326, %v1326
    %v1329 = vpack.c.bf16 %v1327, %v1327
    %v1330 = vld [vmem:[#allocation7] sm:$0xff]
    %v1331 = vld [vmem:[#allocation7 + $0x8] sm:$0xff]
    %v1332 = vld [vmem:[#allocation7 + $0x10] sm:$0xff]
    %v1333 = vld [vmem:[#allocation7 + $0x18] sm:$0xff]
    %v1334 = vld [vmem:[#allocation7 + $0x20] sm:$0xff]
    %v1335 = vld [vmem:[#allocation7 + $0x28] sm:$0xff]
    %v1336 = vld [vmem:[#allocation7 + $0x30] sm:$0xff]
    %v1337 = vld [vmem:[#allocation7 + $0x38] sm:$0xff]
    %v1338 = vld [vmem:[#allocation7 + $0x40] sm:$0xff]
    %v1339 = vld [vmem:[#allocation7 + $0x48] sm:$0xff]
    %v1340 = vld [vmem:[#allocation7 + $0x50] sm:$0xff]
    %v1341 = vld [vmem:[#allocation7 + $0x58] sm:$0xff]
    %v1342 = vld [vmem:[#allocation7 + $0x60] sm:$0xff]
    %v1343 = vld [vmem:[#allocation7 + $0x68] sm:$0xff]
    %v1344 = vld [vmem:[#allocation7 + $0x70] sm:$0xff]
    %v1345 = vld [vmem:[#allocation7 + $0x78] sm:$0xff]
    %v1346 = vld [vmem:[#allocation7 + $0x80] sm:$0xff]
    %v1347 = vld [vmem:[#allocation7 + $0x88] sm:$0xff]
    %v1348 = vld [vmem:[#allocation7 + $0x90] sm:$0xff]
    %v1349 = vld [vmem:[#allocation7 + $0x98] sm:$0xff]
    %v1350 = vld [vmem:[#allocation7 + $0xa0] sm:$0xff]
    %v1351 = vld [vmem:[#allocation7 + $0xa8] sm:$0xff]
    %v1352 = vld [vmem:[#allocation7 + $0xb0] sm:$0xff]
    %v1353 = vld [vmem:[#allocation7 + $0xb8] sm:$0xff]
    %v1354 = vld [vmem:[#allocation7 + $0xc0] sm:$0xff]
    %v1355 = vld [vmem:[#allocation7 + $0xc8] sm:$0xff]
    %v1356 = vld [vmem:[#allocation7 + $0xd0] sm:$0xff]
    %v1357 = vld [vmem:[#allocation7 + $0xd8] sm:$0xff]
    %v1358 = vld [vmem:[#allocation7 + $0xe0] sm:$0xff]
    %v1359 = vld [vmem:[#allocation7 + $0xe8] sm:$0xff]
    %v1360 = vld [vmem:[#allocation7 + $0xf0] sm:$0xff]
    %v1361 = vld [vmem:[#allocation7 + $0xf8] sm:$0xff]
    %v1362 = vld [vmem:[#allocation8] ss:$4 sm:$0x3]
    %v1364 = vlaneseq
    %v1365 = vshrl.u32 %v1364, 7
    %v1366 = vsub.s32 0, %v1365
    %v1367 = vrot.slane %v1362, %v1366
    %v1368 = vlaneseq
    %v1369 = vshrl.u32 %v1368, 7
    %v1370 = vsub.s32 1, %v1369
    %v1371 = vrot.slane %v1362, %v1370
    %v1406 = vunpack.c.l.b16 %v1330
    %v1407 = vunpack.c.h.b16 %v1330
    %v1408 = vunpack.c.l.b16 %v1331
    %v1409 = vunpack.c.h.b16 %v1331
    %v1410 = vunpack.c.l.b16 %v1332
    %v1411 = vunpack.c.h.b16 %v1332
    %v1412 = vunpack.c.l.b16 %v1333
    %v1413 = vunpack.c.h.b16 %v1333
    %v1414 = vunpack.c.l.b16 %v1334
    %v1415 = vunpack.c.h.b16 %v1334
    %v1416 = vunpack.c.l.b16 %v1335
    %v1417 = vunpack.c.h.b16 %v1335
    %v1418 = vunpack.c.l.b16 %v1336
    %v1419 = vunpack.c.h.b16 %v1336
    %v1420 = vunpack.c.l.b16 %v1337
    %v1421 = vunpack.c.h.b16 %v1337
    %v1422 = vunpack.c.l.b16 %v1338
    %v1423 = vunpack.c.h.b16 %v1338
    %v1424 = vunpack.c.l.b16 %v1339
    %v1425 = vunpack.c.h.b16 %v1339
    %v1426 = vunpack.c.l.b16 %v1340
    %v1427 = vunpack.c.h.b16 %v1340
    %v1428 = vunpack.c.l.b16 %v1341
    %v1429 = vunpack.c.h.b16 %v1341
    %v1430 = vunpack.c.l.b16 %v1342
    %v1431 = vunpack.c.h.b16 %v1342
    %v1432 = vunpack.c.l.b16 %v1343
    %v1433 = vunpack.c.h.b16 %v1343
    %v1434 = vunpack.c.l.b16 %v1344
    %v1435 = vunpack.c.h.b16 %v1344
    %v1436 = vunpack.c.l.b16 %v1345
    %v1437 = vunpack.c.h.b16 %v1345
    %v1438 = vunpack.c.l.b16 %v1346
    %v1439 = vunpack.c.h.b16 %v1346
    %v1440 = vunpack.c.l.b16 %v1347
    %v1441 = vunpack.c.h.b16 %v1347
    %v1442 = vunpack.c.l.b16 %v1348
    %v1443 = vunpack.c.h.b16 %v1348
    %v1444 = vunpack.c.l.b16 %v1349
    %v1445 = vunpack.c.h.b16 %v1349
    %v1446 = vunpack.c.l.b16 %v1350
    %v1447 = vunpack.c.h.b16 %v1350
    %v1448 = vunpack.c.l.b16 %v1351
    %v1449 = vunpack.c.h.b16 %v1351
    %v1450 = vunpack.c.l.b16 %v1352
    %v1451 = vunpack.c.h.b16 %v1352
    %v1452 = vunpack.c.l.b16 %v1353
    %v1453 = vunpack.c.h.b16 %v1353
    %v1454 = vunpack.c.l.b16 %v1354
    %v1455 = vunpack.c.h.b16 %v1354
    %v1456 = vunpack.c.l.b16 %v1355
    %v1457 = vunpack.c.h.b16 %v1355
    %v1458 = vunpack.c.l.b16 %v1356
    %v1459 = vunpack.c.h.b16 %v1356
    %v1460 = vunpack.c.l.b16 %v1357
    %v1461 = vunpack.c.h.b16 %v1357
    %v1462 = vunpack.c.l.b16 %v1358
    %v1463 = vunpack.c.h.b16 %v1358
    %v1464 = vunpack.c.l.b16 %v1359
    %v1465 = vunpack.c.h.b16 %v1359
    %v1466 = vunpack.c.l.b16 %v1360
    %v1467 = vunpack.c.h.b16 %v1360
    %v1468 = vunpack.c.l.b16 %v1361
    %v1469 = vunpack.c.h.b16 %v1361
    %v1470 = vpack.c.b16 %v1408, %v1406
    %v1471 = vpack.c.b16 %v1409, %v1407
    %v1472 = vpack.c.b16 %v1412, %v1410
    %v1473 = vpack.c.b16 %v1413, %v1411
    %v1474 = vpack.c.b16 %v1416, %v1414
    %v1475 = vpack.c.b16 %v1417, %v1415
    %v1476 = vpack.c.b16 %v1420, %v1418
    %v1477 = vpack.c.b16 %v1421, %v1419
    %v1478 = vpack.c.b16 %v1424, %v1422
    %v1479 = vpack.c.b16 %v1425, %v1423
    %v1480 = vpack.c.b16 %v1428, %v1426
    %v1481 = vpack.c.b16 %v1429, %v1427
    %v1482 = vpack.c.b16 %v1432, %v1430
    %v1483 = vpack.c.b16 %v1433, %v1431
    %v1484 = vpack.c.b16 %v1436, %v1434
    %v1485 = vpack.c.b16 %v1437, %v1435
    %v1486 = vpack.c.b16 %v1440, %v1438
    %v1487 = vpack.c.b16 %v1441, %v1439
    %v1488 = vpack.c.b16 %v1444, %v1442
    %v1489 = vpack.c.b16 %v1445, %v1443
    %v1490 = vpack.c.b16 %v1448, %v1446
    %v1491 = vpack.c.b16 %v1449, %v1447
    %v1492 = vpack.c.b16 %v1452, %v1450
    %v1493 = vpack.c.b16 %v1453, %v1451
    %v1494 = vpack.c.b16 %v1456, %v1454
    %v1495 = vpack.c.b16 %v1457, %v1455
    %v1496 = vpack.c.b16 %v1460, %v1458
    %v1497 = vpack.c.b16 %v1461, %v1459
    %v1498 = vpack.c.b16 %v1464, %v1462
    %v1499 = vpack.c.b16 %v1465, %v1463
    %v1500 = vpack.c.b16 %v1468, %v1466
    %v1501 = vpack.c.b16 %v1469, %v1467
    %1534 = vmatprep.subr.bf16.mxu0 %v1471
    %1535 = vmatpush1.bf16.msra.mxu0 %v1470
    %1536 = vmatprep.subr.bf16.mxu0 %v1473
    %1537 = vmatpush1.bf16.msra.mxu0 %v1472
    %1538 = vmatprep.subr.bf16.mxu0 %v1475
    %1539 = vmatpush1.bf16.msra.mxu0 %v1474
    %1540 = vmatprep.subr.bf16.mxu0 %v1477
    %1541 = vmatpush1.bf16.msra.mxu0 %v1476
    %1542 = vmatprep.subr.bf16.mxu0 %v1479
    %1543 = vmatpush1.bf16.msra.mxu0 %v1478
    %1544 = vmatprep.subr.bf16.mxu0 %v1481
    %1545 = vmatpush1.bf16.msra.mxu0 %v1480
    %1546 = vmatprep.subr.bf16.mxu0 %v1483
    %1547 = vmatpush1.bf16.msra.mxu0 %v1482
    %1548 = vmatprep.subr.bf16.mxu0 %v1485
    %1549 = vmatpush1.bf16.msra.mxu0 %v1484
    %1550 = vmatprep.subr.bf16.mxu0 %v1487
    %1551 = vmatpush1.bf16.msra.mxu0 %v1486
    %1552 = vmatprep.subr.bf16.mxu0 %v1489
    %1553 = vmatpush1.bf16.msra.mxu0 %v1488
    %1554 = vmatprep.subr.bf16.mxu0 %v1491
    %1555 = vmatpush1.bf16.msra.mxu0 %v1490
    %1556 = vmatprep.subr.bf16.mxu0 %v1493
    %1557 = vmatpush1.bf16.msra.mxu0 %v1492
    %1558 = vmatprep.subr.bf16.mxu0 %v1495
    %1559 = vmatpush1.bf16.msra.mxu0 %v1494
    %1560 = vmatprep.subr.bf16.mxu0 %v1497
    %1561 = vmatpush1.bf16.msra.mxu0 %v1496
    %1562 = vmatprep.subr.bf16.mxu0 %v1499
    %1563 = vmatpush1.bf16.msra.mxu0 %v1498
    %1564 = vmatprep.subr.bf16.mxu0 %v1501
    %1565 = vmatpush1.bf16.msra.mxu0 %v1500
    %1566 = vmatprep.mubr.bf16.mxu0 %v1329
    %1567 = vmatmul.mubr.bf16.gmra.mrb[0].mxu0 %v1328
    %v1568 = vpop.f32.mrb[0].mxu0
    %v1569 = vadd.f32 %v1367, %v1568
    %v1570 = vpop.f32.mrb[0].mxu0
    %v1571 = vadd.f32 %v1371, %v1570
    %v1572 = vpop.f32.mrb[0].mxu0
    %v1573 = vpop.f32.mrb[0].mxu0
    %1574 = vdwg.mxu0
    %v1575 = vrot.slane %v1569, 4
    %v1576 = vadd.f32 %v1569, %v1575
    %v1577 = vrot.slane %v1576, 2
    %v1578 = vadd.f32 %v1576, %v1577
    %v1579 = vrot.slane %v1578, 1
    %v1580 = vadd.f32 %v1578, %v1579
    %v1581 = vrot.slane %v1571, 4
    %v1582 = vadd.f32 %v1571, %v1581
    %v1583 = vrot.slane %v1582, 2
    %v1584 = vadd.f32 %v1582, %v1583
    %v1585 = vrot.slane %v1584, 1
    %v1586 = vadd.f32 %v1584, %v1585
    %v1587 = vmul.f32 %v1580, %v413
    %v1588 = vmul.f32 %v1586, %v413
    %v1589 = vsub.f32 %v1569, %v1587
    %v1590 = vsub.f32 %v1571, %v1588
    %v1591 = vmul.f32 %v1589, %v1589
    %v1592 = vmul.f32 %v1590, %v1590
    %v1593 = vrot.slane %v1591, 4
    %v1594 = vadd.f32 %v1591, %v1593
    %v1595 = vrot.slane %v1594, 2
    %v1596 = vadd.f32 %v1594, %v1595
    %v1597 = vrot.slane %v1596, 1
    %v1598 = vadd.f32 %v1596, %v1597
    %v1599 = vrot.slane %v1592, 4
    %v1600 = vadd.f32 %v1592, %v1599
    %v1601 = vrot.slane %v1600, 2
    %v1602 = vadd.f32 %v1600, %v1601
    %v1603 = vrot.slane %v1602, 1
    %v1604 = vadd.f32 %v1602, %v1603
    %v1605 = vmul.f32 %v1598, %v413
    %v1606 = vmul.f32 %v1604, %v413
    %v1607 = vadd.f32 %v1605, 1e-05
    %v1608 = vadd.f32 %v1606, 1e-05
    %v1609 = vrsqrt.pop %v1607
    %v1610 = vrsqrt.pop %v1608
    %v1611 = vmul.f32 %v1589, %v1609
    %v1612 = vmul.f32 %v1590, %v1610
    %s1613 = scalar_lea.vmem [#allocation8], 1
    %v1614 = vld [vmem:[%s1613] ss:$4 sm:$0x3]
    %v1616 = vlaneseq
    %v1617 = vshrl.u32 %v1616, 7
    %v1618 = vsub.s32 0, %v1617
    %v1619 = vrot.slane %v1614, %v1618
    %v1620 = vlaneseq
    %v1621 = vshrl.u32 %v1620, 7
    %v1622 = vsub.s32 1, %v1621
    %v1623 = vrot.slane %v1614, %v1622
    %v1626 = vmul.f32 %v1611, %v1619
    %v1627 = vmul.f32 %v1612, %v1623
    %s1628 = scalar_lea.vmem [#allocation8], 2
    %v1629 = vld [vmem:[%s1628] ss:$4 sm:$0x3]
    %v1631 = vlaneseq
    %v1632 = vshrl.u32 %v1631, 7
    %v1633 = vsub.s32 0, %v1632
    %v1634 = vrot.slane %v1629, %v1633
    %v1635 = vlaneseq
    %v1636 = vshrl.u32 %v1635, 7
    %v1637 = vsub.s32 1, %v1636
    %v1638 = vrot.slane %v1629, %v1637
    %v1641 = vadd.f32 %v1626, %v1634
    %v1642 = vadd.f32 %v1627, %v1638
    %v1643 = vmul.f32 %v1641, 0.01
    %v1644 = vmul.f32 %v1642, 0.01
    %v1645 = vmax.f32 %v1641, %v1643
    %v1646 = vmax.f32 %v1642, %v1644
    %v1647 = vpack.c.bf16 %v1645, %v1645
    %v1648 = vpack.c.bf16 %v1646, %v1646
    %v1649 = vld [vmem:[#allocation10] sm:$0xff]
    %v1650 = vld [vmem:[#allocation10 + $0x8] sm:$0xff]
    %v1651 = vld [vmem:[#allocation10 + $0x10] sm:$0xff]
    %v1652 = vld [vmem:[#allocation10 + $0x18] sm:$0xff]
    %v1653 = vld [vmem:[#allocation10 + $0x20] sm:$0xff]
    %v1654 = vld [vmem:[#allocation10 + $0x28] sm:$0xff]
    %v1655 = vld [vmem:[#allocation10 + $0x30] sm:$0xff]
    %v1656 = vld [vmem:[#allocation10 + $0x38] sm:$0xff]
    %v1657 = vld [vmem:[#allocation10 + $0x40] sm:$0xff]
    %v1658 = vld [vmem:[#allocation10 + $0x48] sm:$0xff]
    %v1659 = vld [vmem:[#allocation10 + $0x50] sm:$0xff]
    %v1660 = vld [vmem:[#allocation10 + $0x58] sm:$0xff]
    %v1661 = vld [vmem:[#allocation10 + $0x60] sm:$0xff]
    %v1662 = vld [vmem:[#allocation10 + $0x68] sm:$0xff]
    %v1663 = vld [vmem:[#allocation10 + $0x70] sm:$0xff]
    %v1664 = vld [vmem:[#allocation10 + $0x78] sm:$0xff]
    %v1665 = vld [vmem:[#allocation10 + $0x80] sm:$0xff]
    %v1666 = vld [vmem:[#allocation10 + $0x88] sm:$0xff]
    %v1667 = vld [vmem:[#allocation10 + $0x90] sm:$0xff]
    %v1668 = vld [vmem:[#allocation10 + $0x98] sm:$0xff]
    %v1669 = vld [vmem:[#allocation10 + $0xa0] sm:$0xff]
    %v1670 = vld [vmem:[#allocation10 + $0xa8] sm:$0xff]
    %v1671 = vld [vmem:[#allocation10 + $0xb0] sm:$0xff]
    %v1672 = vld [vmem:[#allocation10 + $0xb8] sm:$0xff]
    %v1673 = vld [vmem:[#allocation10 + $0xc0] sm:$0xff]
    %v1674 = vld [vmem:[#allocation10 + $0xc8] sm:$0xff]
    %v1675 = vld [vmem:[#allocation10 + $0xd0] sm:$0xff]
    %v1676 = vld [vmem:[#allocation10 + $0xd8] sm:$0xff]
    %v1677 = vld [vmem:[#allocation10 + $0xe0] sm:$0xff]
    %v1678 = vld [vmem:[#allocation10 + $0xe8] sm:$0xff]
    %v1679 = vld [vmem:[#allocation10 + $0xf0] sm:$0xff]
    %v1680 = vld [vmem:[#allocation10 + $0xf8] sm:$0xff]
    %v1681 = vld [vmem:[#allocation11] sm:$0x3]
    %v1683 = vlaneseq
    %v1684 = vshrl.u32 %v1683, 7
    %v1685 = vsub.s32 0, %v1684
    %v1686 = vrot.slane %v1681, %v1685
    %v1687 = vlaneseq
    %v1688 = vshrl.u32 %v1687, 7
    %v1689 = vsub.s32 1, %v1688
    %v1690 = vrot.slane %v1681, %v1689
    %v1725 = vunpack.c.l.b16 %v1649
    %v1726 = vunpack.c.h.b16 %v1649
    %v1727 = vunpack.c.l.b16 %v1650
    %v1728 = vunpack.c.h.b16 %v1650
    %v1729 = vunpack.c.l.b16 %v1651
    %v1730 = vunpack.c.h.b16 %v1651
    %v1731 = vunpack.c.l.b16 %v1652
    %v1732 = vunpack.c.h.b16 %v1652
    %v1733 = vunpack.c.l.b16 %v1653
    %v1734 = vunpack.c.h.b16 %v1653
    %v1735 = vunpack.c.l.b16 %v1654
    %v1736 = vunpack.c.h.b16 %v1654
    %v1737 = vunpack.c.l.b16 %v1655
    %v1738 = vunpack.c.h.b16 %v1655
    %v1739 = vunpack.c.l.b16 %v1656
    %v1740 = vunpack.c.h.b16 %v1656
    %v1741 = vunpack.c.l.b16 %v1657
    %v1742 = vunpack.c.h.b16 %v1657
    %v1743 = vunpack.c.l.b16 %v1658
    %v1744 = vunpack.c.h.b16 %v1658
    %v1745 = vunpack.c.l.b16 %v1659
    %v1746 = vunpack.c.h.b16 %v1659
    %v1747 = vunpack.c.l.b16 %v1660
    %v1748 = vunpack.c.h.b16 %v1660
    %v1749 = vunpack.c.l.b16 %v1661
    %v1750 = vunpack.c.h.b16 %v1661
    %v1751 = vunpack.c.l.b16 %v1662
    %v1752 = vunpack.c.h.b16 %v1662
    %v1753 = vunpack.c.l.b16 %v1663
    %v1754 = vunpack.c.h.b16 %v1663
    %v1755 = vunpack.c.l.b16 %v1664
    %v1756 = vunpack.c.h.b16 %v1664
    %v1757 = vunpack.c.l.b16 %v1665
    %v1758 = vunpack.c.h.b16 %v1665
    %v1759 = vunpack.c.l.b16 %v1666
    %v1760 = vunpack.c.h.b16 %v1666
    %v1761 = vunpack.c.l.b16 %v1667
    %v1762 = vunpack.c.h.b16 %v1667
    %v1763 = vunpack.c.l.b16 %v1668
    %v1764 = vunpack.c.h.b16 %v1668
    %v1765 = vunpack.c.l.b16 %v1669
    %v1766 = vunpack.c.h.b16 %v1669
    %v1767 = vunpack.c.l.b16 %v1670
    %v1768 = vunpack.c.h.b16 %v1670
    %v1769 = vunpack.c.l.b16 %v1671
    %v1770 = vunpack.c.h.b16 %v1671
    %v1771 = vunpack.c.l.b16 %v1672
    %v1772 = vunpack.c.h.b16 %v1672
    %v1773 = vunpack.c.l.b16 %v1673
    %v1774 = vunpack.c.h.b16 %v1673
    %v1775 = vunpack.c.l.b16 %v1674
    %v1776 = vunpack.c.h.b16 %v1674
    %v1777 = vunpack.c.l.b16 %v1675
    %v1778 = vunpack.c.h.b16 %v1675
    %v1779 = vunpack.c.l.b16 %v1676
    %v1780 = vunpack.c.h.b16 %v1676
    %v1781 = vunpack.c.l.b16 %v1677
    %v1782 = vunpack.c.h.b16 %v1677
    %v1783 = vunpack.c.l.b16 %v1678
    %v1784 = vunpack.c.h.b16 %v1678
    %v1785 = vunpack.c.l.b16 %v1679
    %v1786 = vunpack.c.h.b16 %v1679
    %v1787 = vunpack.c.l.b16 %v1680
    %v1788 = vunpack.c.h.b16 %v1680
    %v1789 = vpack.c.b16 %v1727, %v1725
    %v1790 = vpack.c.b16 %v1728, %v1726
    %v1791 = vpack.c.b16 %v1731, %v1729
    %v1792 = vpack.c.b16 %v1732, %v1730
    %v1793 = vpack.c.b16 %v1735, %v1733
    %v1794 = vpack.c.b16 %v1736, %v1734
    %v1795 = vpack.c.b16 %v1739, %v1737
    %v1796 = vpack.c.b16 %v1740, %v1738
    %v1797 = vpack.c.b16 %v1743, %v1741
    %v1798 = vpack.c.b16 %v1744, %v1742
    %v1799 = vpack.c.b16 %v1747, %v1745
    %v1800 = vpack.c.b16 %v1748, %v1746
    %v1801 = vpack.c.b16 %v1751, %v1749
    %v1802 = vpack.c.b16 %v1752, %v1750
    %v1803 = vpack.c.b16 %v1755, %v1753
    %v1804 = vpack.c.b16 %v1756, %v1754
    %v1805 = vpack.c.b16 %v1759, %v1757
    %v1806 = vpack.c.b16 %v1760, %v1758
    %v1807 = vpack.c.b16 %v1763, %v1761
    %v1808 = vpack.c.b16 %v1764, %v1762
    %v1809 = vpack.c.b16 %v1767, %v1765
    %v1810 = vpack.c.b16 %v1768, %v1766
    %v1811 = vpack.c.b16 %v1771, %v1769
    %v1812 = vpack.c.b16 %v1772, %v1770
    %v1813 = vpack.c.b16 %v1775, %v1773
    %v1814 = vpack.c.b16 %v1776, %v1774
    %v1815 = vpack.c.b16 %v1779, %v1777
    %v1816 = vpack.c.b16 %v1780, %v1778
    %v1817 = vpack.c.b16 %v1783, %v1781
    %v1818 = vpack.c.b16 %v1784, %v1782
    %v1819 = vpack.c.b16 %v1787, %v1785
    %v1820 = vpack.c.b16 %v1788, %v1786
    %1853 = vmatprep.subr.bf16.mxu0 %v1790
    %1854 = vmatpush1.bf16.msra.mxu0 %v1789
    %1855 = vmatprep.subr.bf16.mxu0 %v1792
    %1856 = vmatpush1.bf16.msra.mxu0 %v1791
    %1857 = vmatprep.subr.bf16.mxu0 %v1794
    %1858 = vmatpush1.bf16.msra.mxu0 %v1793
    %1859 = vmatprep.subr.bf16.mxu0 %v1796
    %1860 = vmatpush1.bf16.msra.mxu0 %v1795
    %1861 = vmatprep.subr.bf16.mxu0 %v1798
    %1862 = vmatpush1.bf16.msra.mxu0 %v1797
    %1863 = vmatprep.subr.bf16.mxu0 %v1800
    %1864 = vmatpush1.bf16.msra.mxu0 %v1799
    %1865 = vmatprep.subr.bf16.mxu0 %v1802
    %1866 = vmatpush1.bf16.msra.mxu0 %v1801
    %1867 = vmatprep.subr.bf16.mxu0 %v1804
    %1868 = vmatpush1.bf16.msra.mxu0 %v1803
    %1869 = vmatprep.subr.bf16.mxu0 %v1806
    %1870 = vmatpush1.bf16.msra.mxu0 %v1805
    %1871 = vmatprep.subr.bf16.mxu0 %v1808
    %1872 = vmatpush1.bf16.msra.mxu0 %v1807
    %1873 = vmatprep.subr.bf16.mxu0 %v1810
    %1874 = vmatpush1.bf16.msra.mxu0 %v1809
    %1875 = vmatprep.subr.bf16.mxu0 %v1812
    %1876 = vmatpush1.bf16.msra.mxu0 %v1811
    %1877 = vmatprep.subr.bf16.mxu0 %v1814
    %1878 = vmatpush1.bf16.msra.mxu0 %v1813
    %1879 = vmatprep.subr.bf16.mxu0 %v1816
    %1880 = vmatpush1.bf16.msra.mxu0 %v1815
    %1881 = vmatprep.subr.bf16.mxu0 %v1818
    %1882 = vmatpush1.bf16.msra.mxu0 %v1817
    %1883 = vmatprep.subr.bf16.mxu0 %v1820
    %1884 = vmatpush1.bf16.msra.mxu0 %v1819
    %1885 = vmatprep.mubr.bf16.mxu0 %v1648
    %1886 = vmatmul.mubr.bf16.gmra.mrb[0].mxu0 %v1647
    %v1887 = vpop.f32.mrb[0].mxu0
    %v1888 = vadd.f32 %v1686, %v1887
    %v1889 = vpop.f32.mrb[0].mxu0
    %v1890 = vadd.f32 %v1690, %v1889
    %v1891 = vpop.f32.mrb[0].mxu0
    %v1892 = vpop.f32.mrb[0].mxu0
    %1893 = vdwg.mxu0
    %1894 = vst [vmem:[#allocation18] sm:$0xff] %v1888
    %1895 = vst [vmem:[#allocation18 + $0x8] sm:$0xff] %v1890
    %v1896 = vld [vmem:[#allocation13] sm:$0x3]
    %v1897 = vsub.f32 %v1896, -7.0
    %v1898 = vmax.f32 %v1897, 0.0
    %v1899 = vand.u32 2147483647, %v1897
    %v1900 = vsub.f32 0.0, %v1899
    %v1901 = vmul.f32 %v1900, 1.442695
    %v1902 = vpow.pop %v1901
    %v1903 = vadd.f32 %v1902, 1.0
    %v1904 = vlog2.pop %v1903
    %v1905 = vmul.f32 %v1904, 0.6931472
    %v1906 = vadd.f32 %v1898, %v1905
    %v1907 = vadd.f32 %v1906, -7.0
    %v1908 = vsub.f32 %v1896, 7.0
    %v1909 = vmax.f32 %v1908, 0.0
    %v1910 = vand.u32 2147483647, %v1908
    %v1911 = vsub.f32 0.0, %v1910
    %v1912 = vmul.f32 %v1911, 1.442695
    %v1913 = vpow.pop %v1912
    %v1914 = vadd.f32 %v1913, 1.0
    %v1915 = vlog2.pop %v1914
    %v1916 = vmul.f32 %v1915, 0.6931472
    %v1917 = vadd.f32 %v1909, %v1916
    %v1918 = vsub.f32 %v1907, %v1917
    %v1919 = vmul.f32 %v1918, -2.0
    %v1920 = vmul.f32 %v1919, 1.442695
    %v1921 = vpow.pop %v1920
    %v1922 = vsub.f32 %v152, %v1888
    %v1923 = vsub.f32 %v153, %v1890
    %v1924 = vmul.f32 %v1922, 0.5
    %v1925 = vmul.f32 %v1923, 0.5
    %v1926 = vmul.f32 %v1924, %v1922
    %v1927 = vmul.f32 %v1925, %v1923
    %v1929 = vlaneseq
    %v1930 = vshrl.u32 %v1929, 7
    %v1931 = vsub.s32 0, %v1930
    %v1932 = vrot.slane %v1921, %v1931
    %v1933 = vlaneseq
    %v1934 = vshrl.u32 %v1933, 7
    %v1935 = vsub.s32 1, %v1934
    %v1936 = vrot.slane %v1921, %v1935
    %v1939 = vmul.f32 %v1926, %v1932
    %v1940 = vmul.f32 %v1927, %v1936
    %v1942 = vlaneseq
    %v1943 = vshrl.u32 %v1942, 7
    %v1944 = vsub.s32 0, %v1943
    %v1945 = vrot.slane %v1918, %v1944
    %v1946 = vlaneseq
    %v1947 = vshrl.u32 %v1946, 7
    %v1948 = vsub.s32 1, %v1947
    %v1949 = vrot.slane %v1918, %v1948
    %v1952 = vadd.f32 %v1939, %v1945
    %v1953 = vadd.f32 %v1940, %v1949
    %v1954 = vadd.f32 %v1952, 0.9189385
    %v1955 = vadd.f32 %v1953, 0.9189385
    %v1956 = vadd.f32 %v1954, %v1955
    %1957 = vadd.xlane.f32.xlu0 %v1956
    %v1958 = vpop.xlane.xlu0 %1957
    %v1959 = vrot.slane %v1958, 4
    %v1960 = vadd.f32 %v1958, %v1959
    %v1961 = vrot.slane %v1960, 2
    %v1962 = vadd.f32 %v1960, %v1961
    %v1963 = vrot.slane %v1962, 1
    %v1964 = vadd.f32 %v1962, %v1963
    %v1965 = vmul.f32 %v1964, 0.125
    %v1966 = vadd.f32 %v1136, 1.0
    %v1967 = vmul.f32 %v963, %v963
    %v1968 = vsub.f32 %v1966, %v1967
    %v1969 = vmul.f32 %v1136, 1.442695
    %v1970 = vpow.pop %v1969
    %v1971 = vsub.f32 %v1968, %v1970
    %v1972 = vmul.f32 %v1971, -0.5
    %v1973 = vsel %vm1147, %v1972, 0.0
    %1974 = vadd.xlane.f32.xlu0 %v1973
    %v1975 = vpop.xlane.xlu0 %1974
    %v1976 = vrot.slane %v1975, 4
    %v1977 = vadd.f32 %v1975, %v1976
    %v1978 = vrot.slane %v1977, 2
    %v1979 = vadd.f32 %v1977, %v1978
    %v1980 = vrot.slane %v1979, 1
    %v1981 = vadd.f32 %v1979, %v1980
    %v1982 = vmul.f32 %v1981, 0.125
    %vm1983 = vcmask 0
    %1984 = vst.msk [vmem:[#allocation20] sm:$0x1] %vm1983, %v1965
    %1985 = vst.msk [vmem:[#allocation21] sm:$0x1] %vm1983, %v1982
    %v1986 = vadd.f32 %v1965, %v1982
    %1987 = vst.msk [vmem:[#allocation23] sm:$0x1] %vm1983, %v1986
    // Predicated region
    $region94: #{vae_type00_forward.1} parent=1 // pred_check
      _
    $region95: #{vae_type00_forward.1} parent=1 // pred_check_branch
      %1989 = sbr.rel (0) target = $region97
    $region96: #{vae_type00_forward.1} parent=1 // pred_region
      %s1991 = ssub.s32 128, 128
      %1992 = vsyncadd [#allocation4], %s1991
      %s1994 = sshll.u32 [#allocation14], 4
      %s1995 = int_to_ptr.vmem [resolvable:$true] %s1994
      %1997 = dma.vmem_to_hbm [thread:$0]  %s1995, 128, %s16, [#allocation4]
    $region97: #{vae_type00_forward.1} parent=1 // pred_fallthru
      _
    // Predicated region
    $region98: #{vae_type00_forward.1} parent=1 // pred_check
      _
    $region99: #{vae_type00_forward.1} parent=1 // pred_check_branch
      %1999 = sbr.rel (0) target = $region101
    $region100: #{vae_type00_forward.1} parent=1 // pred_region
      %s2001 = ssub.s32 128, 128
      %2002 = vsyncadd [#allocation16], %s2001
      %s2004 = sshll.u32 [#allocation15], 4
      %s2005 = int_to_ptr.vmem [resolvable:$true] %s2004
      %2007 = dma.vmem_to_hbm [thread:$0]  %s2005, 128, %s17, [#allocation16]
    $region101: #{vae_type00_forward.1} parent=1 // pred_fallthru
      _
    // Predicated region
    $region102: #{vae_type00_forward.1} parent=1 // pred_check
      _
    $region103: #{vae_type00_forward.1} parent=1 // pred_check_branch
      %2009 = sbr.rel (0) target = $region105
    $region104: #{vae_type00_forward.1} parent=1 // pred_region
      %s2011 = ssub.s32 128, 128
      %2012 = vsyncadd [#allocation16], %s2011
      %s2014 = sshll.u32 [#allocation17], 4
      %s2015 = int_to_ptr.vmem [resolvable:$true] %s2014
      %2017 = dma.vmem_to_hbm [thread:$0]  %s2015, 128, %s18, [#allocation16]
    $region105: #{vae_type00_forward.1} parent=1 // pred_fallthru
      _
    // Predicated region
    $region106: #{vae_type00_forward.1} parent=1 // pred_check
      _
    $region107: #{vae_type00_forward.1} parent=1 // pred_check_branch
      %2019 = sbr.rel (0) target = $region109
    $region108: #{vae_type00_forward.1} parent=1 // pred_region
      %s2021 = ssub.s32 256, 256
      %2022 = vsyncadd [#allocation19], %s2021
      %s2024 = sshll.u32 [#allocation18], 4
      %s2025 = int_to_ptr.vmem [resolvable:$true] %s2024
      %2027 = dma.vmem_to_hbm [thread:$0]  %s2025, 256, %s19, [#allocation19]
    $region109: #{vae_type00_forward.1} parent=1 // pred_fallthru
      _
    // Predicated region
    $region110: #{vae_type00_forward.1} parent=1 // pred_check
      _
    $region111: #{vae_type00_forward.1} parent=1 // pred_check_branch
      %2029 = sbr.rel (0) target = $region113
    $region112: #{vae_type00_forward.1} parent=1 // pred_region
      %s2031 = ssub.s32 16, 16
      %2032 = vsyncadd [#allocation19], %s2031
      %s2034 = sshll.u32 [#allocation20], 4
      %s2035 = int_to_ptr.vmem [resolvable:$true] %s2034
      %2037 = dma.vmem_to_hbm [thread:$0]  %s2035, 16, %s20, [#allocation19]
    $region113: #{vae_type00_forward.1} parent=1 // pred_fallthru
      _
    // Predicated region
    $region114: #{vae_type00_forward.1} parent=1 // pred_check
      _
    $region115: #{vae_type00_forward.1} parent=1 // pred_check_branch
      %2039 = sbr.rel (0) target = $region117
    $region116: #{vae_type00_forward.1} parent=1 // pred_region
      %s2041 = ssub.s32 16, 16
      %2042 = vsyncadd [#allocation22], %s2041
      %s2044 = sshll.u32 [#allocation21], 4
      %s2045 = int_to_ptr.vmem [resolvable:$true] %s2044
      %2047 = dma.vmem_to_hbm [thread:$0]  %s2045, 16, %s21, [#allocation22]
    $region117: #{vae_type00_forward.1} parent=1 // pred_fallthru
      _
    // Predicated region
    $region118: #{vae_type00_forward.1} parent=1 // pred_check
      _
    $region119: #{vae_type00_forward.1} parent=1 // pred_check_branch
      %2049 = sbr.rel (0) target = $region121
    $region120: #{vae_type00_forward.1} parent=1 // pred_region
      %s2051 = ssub.s32 16, 16
      %2052 = vsyncadd [#allocation22], %s2051
      %s2054 = sshll.u32 [#allocation23], 4
      %s2055 = int_to_ptr.vmem [resolvable:$true] %s2054
      %2057 = dma.vmem_to_hbm [thread:$0]  %s2055, 16, %s22, [#allocation22]
    $region121: #{vae_type00_forward.1} parent=1 // pred_fallthru
      _
    // Predicated region
    $region122: #{vae_type00_forward.1} parent=1 // pred_check
      _
    $region123: #{vae_type00_forward.1} parent=1 // pred_check_branch
      %2059 = sbr.rel (0) target = $region125
    $region124: #{vae_type00_forward.1} parent=1 // pred_region
      %2060 = dma.done [#allocation4], 128
    $region125: #{vae_type00_forward.1} parent=1 // pred_fallthru
      _
    // Predicated region
    $region126: #{vae_type00_forward.1} parent=1 // pred_check
      _
    $region127: #{vae_type00_forward.1} parent=1 // pred_check_branch
      %2062 = sbr.rel (0) target = $region129
    $region128: #{vae_type00_forward.1} parent=1 // pred_region
      %2063 = dma.done [#allocation16], 128
    $region129: #{vae_type00_forward.1} parent=1 // pred_fallthru
      _
    // Predicated region
    $region130: #{vae_type00_forward.1} parent=1 // pred_check
      _
    $region131: #{vae_type00_forward.1} parent=1 // pred_check_branch
      %2065 = sbr.rel (0) target = $region133
    $region132: #{vae_type00_forward.1} parent=1 // pred_region
      %2066 = dma.done [#allocation16], 128
    $region133: #{vae_type00_forward.1} parent=1 // pred_fallthru
      _
    // Predicated region
    $region134: #{vae_type00_forward.1} parent=1 // pred_check
      _
    $region135: #{vae_type00_forward.1} parent=1 // pred_check_branch
      %2068 = sbr.rel (0) target = $region137
    $region136: #{vae_type00_forward.1} parent=1 // pred_region
      %2069 = dma.done [#allocation19], 256
    $region137: #{vae_type00_forward.1} parent=1 // pred_fallthru
      _
    // Predicated region
    $region138: #{vae_type00_forward.1} parent=1 // pred_check
      _
    $region139: #{vae_type00_forward.1} parent=1 // pred_check_branch
      %2071 = sbr.rel (0) target = $region141
    $region140: #{vae_type00_forward.1} parent=1 // pred_region
      %2072 = dma.done [#allocation19], 16
    $region141: #{vae_type00_forward.1} parent=1 // pred_fallthru
      _
    // Predicated region
    $region142: #{vae_type00_forward.1} parent=1 // pred_check
      _
    $region143: #{vae_type00_forward.1} parent=1 // pred_check_branch
      %2074 = sbr.rel (0) target = $region145
    $region144: #{vae_type00_forward.1} parent=1 // pred_region
      %2075 = dma.done [#allocation22], 16
    $region145: #{vae_type00_forward.1} parent=1 // pred_fallthru
      _
    // Predicated region
    $region146: #{vae_type00_forward.1} parent=1 // pred_check
      _
    $region147: #{vae_type00_forward.1} parent=1 // pred_check_branch
      %2077 = sbr.rel (0) target = $region149
    $region148: #{vae_type00_forward.1} parent=1 // pred_region
      %2078 = dma.done [#allocation22], 16
    $region149: #{vae_type00_forward.1} parent=1 // pred_fallthru
      _
    %2079 = vsyncpa [#allocation3], 1
    %2080 = vsyncpa [#allocation6], 1
    %2081 = vsyncpa [#allocation9], 1
    %2082 = vsyncpa [#allocation12], 1
    %2083 = vsyncpa [#allocation4], 1
    %2084 = vsyncpa [#allocation16], 1
    %2085 = vsyncpa [#allocation19], 1
    %2086 = vsyncpa [#allocation22], 1

</llo_original>
